<compile_context>
chip_gen: v5e
topology: v5e:2x2
jax: 0.10.0
libtpu: 0.0.40
codegen_flags: <defaults>
</compile_context>

<pallas_src>
import functools

import jax
import jax.numpy as jnp
from jax import lax
from jax.experimental import pallas as pl
from jax.experimental.pallas import tpu as pltpu


_NUM_CORES = 2  # split the batch reduction across 2 TensorCores (v7x); a 1-TC
                # chip simply runs the leading "parallel" axis sequentially.


def _vicreg_accum_kernel(z1_ref, z2_ref, g1_ref, g2_ref, s1_ref, s2_ref, dsq_ref):
    """Accumulate raw second moments for one (block_n, D) batch tile."""
    i = pl.program_id(1)

    z1 = z1_ref[...]          # native dtype, fed straight into the MXU
    z2 = z2_ref[...]

    # Per-tile contributions (f32 accumulation on the VPU).
    cs1 = jnp.sum(z1, axis=0, keepdims=True, dtype=jnp.float32)      # (1, D)
    cs2 = jnp.sum(z2, axis=0, keepdims=True, dtype=jnp.float32)
    diff = (z1 - z2).astype(jnp.float32)
    dsq = jnp.sum(diff * diff, axis=0, keepdims=True)                # (1, D)

    # Raw grams z^T z on the MXU (contract over the batch/tile axis). Keep the
    # input dtype; for f32 inputs request HIGHEST so diag(gram) is precise
    # enough for the variance term.
    dn = (((0,), (0,)), ((), ()))
    prec = lax.Precision.HIGHEST if z1.dtype == jnp.float32 else None
    g1 = lax.dot_general(z1, z1, dn, precision=prec,
                         preferred_element_type=jnp.float32)
    g2 = lax.dot_general(z2, z2, dn, precision=prec,
                         preferred_element_type=jnp.float32)

    @pl.when(i == 0)
    def _first():   # direct write on the first tile: no memset + RMW
        g1_ref[...] = g1
        g2_ref[...] = g2
        dsq_ref[...] = dsq
        s1_ref[...] = jnp.zeros_like(s1_ref)
        s2_ref[...] = jnp.zeros_like(s2_ref)
        s1_ref[0:1, :] = cs1
        s2_ref[0:1, :] = cs2

    @pl.when(i > 0)
    def _accum():
        g1_ref[...] += g1
        g2_ref[...] += g2
        dsq_ref[...] += dsq
        s1_ref[0:1, :] += cs1
        s2_ref[0:1, :] += cs2


def _vicreg_finalize_kernel(g1_ref, g2_ref, s1_ref, s2_ref, dsq_ref, out_ref,
                            *, l, mu, nu, n_total):
    d = g1_ref.shape[-1]
    inv_n = 1.0 / float(n_total)
    inv_nm1 = 1.0 / float(max(n_total - 1, 1))
    inv_d = 1.0 / float(d)

    g1 = g1_ref[...]
    g2 = g2_ref[...]
    s1 = s1_ref[...]          # (8, D): row 0 = column sums, rows 1..7 = 0
    s2 = s2_ref[...]
    s1r = s1[0:1, :]
    s2r = s2[0:1, :]

    # invariance term: MSE(z1, z2)
    sim_loss = jnp.sum(dsq_ref[...]) * (inv_n * inv_d)

    # per-column sums of squares recovered from diag(gram) (q1/q2 removed)
    rows = lax.broadcasted_iota(jnp.int32, (d, d), 0)
    cols = lax.broadcasted_iota(jnp.int32, (d, d), 1)
    eye = rows == cols
    q1 = jnp.sum(jnp.where(eye, g1, 0.0), axis=0, keepdims=True)     # (1, D)
    q2 = jnp.sum(jnp.where(eye, g2, 0.0), axis=0, keepdims=True)

    # variance term (unbiased variance, matching torch .var(dim=0))
    var1_raw = q1 - s1r * s1r * inv_n     # sum of centered squares per column
    var2_raw = q2 - s2r * s2r * inv_n
    std1 = jnp.sqrt(var1_raw * inv_nm1 + 1e-4)
    std2 = jnp.sqrt(var2_raw * inv_nm1 + 1e-4)
    std_loss = (jnp.sum(jnp.maximum(1.0 - std1, 0.0))
                + jnp.sum(jnp.maximum(1.0 - std2, 0.0))) * inv_d

    # covariance term via
    #   sum((G - s s^T/N)^2) = sum(G^2) - (2/N) s^T G s + (||s||^2)^2 / N^2
    # and trace subtraction for the off-diagonal part: no (D, D) outer-product
    # temporaries, only fused reductions over G.
    s1g = jnp.dot(s1, g1, preferred_element_type=jnp.float32)        # (8, D)
    s2g = jnp.dot(s2, g2, preferred_element_type=jnp.float32)
    sgs1 = jnp.sum(s1g * s1)
    sgs2 = jnp.sum(s2g * s2)
    sn1 = jnp.sum(s1r * s1r)
    sn2 = jnp.sum(s2r * s2r)
    sumsq_c1 = jnp.sum(g1 * g1) - 2.0 * inv_n * sgs1 + sn1 * sn1 * (inv_n * inv_n)
    sumsq_c2 = jnp.sum(g2 * g2) - 2.0 * inv_n * sgs2 + sn2 * sn2 * (inv_n * inv_n)
    off1 = sumsq_c1 - jnp.sum(var1_raw * var1_raw)
    off2 = sumsq_c2 - jnp.sum(var2_raw * var2_raw)
    cov_loss = (off1 + off2) * (inv_nm1 * inv_nm1 * inv_d)

    # NOTE: raw (non-centered) moments can cancel badly if column means are
    # huge vs. stds; fine for the normalized embeddings VICReg uses.
    out_ref[0, 0] = (float(l) * sim_loss + float(mu) * std_loss
                     + float(nu) * cov_loss)


def _round_up(x, m):
    return ((x + m - 1) // m) * m


def _vmem_budget_bytes():
    """Generation-aware scoped-VMEM budget (leave compiler headroom)."""
    try:
        cap = int(pltpu.get_tpu_info().vmem_capacity_bytes)  # 64 MiB v7x, 128 MiB v5e/v6e
    except Exception:
        cap = 64 << 20                                       # conservative fallback
    return max(cap - (16 << 20), 24 << 20)


def vicreg_loss(z1, z2, l=25, mu=25, nu=1, block_n=None):
    assert z1.shape == z2.shape and z1.ndim == 2
    n, d = z1.shape
    itemsize = jnp.dtype(z1.dtype).itemsize
    granule = max(8, 32 // itemsize)              # sublane granularity: 8 f32 / 16 bf16

    budget = _vmem_budget_bytes()
    acc_bytes = (2 * d * d + 2 * 8 * d + d) * 4   # resident per-core accumulators
    # TODO(synk): for VICReg-scale D (4096-8192) the (D,D) gram must be tiled over
    # feature blocks (extra grid axes); here it is kept fully resident in VMEM.
    avail = budget - acc_bytes - (2 << 20)
    assert avail >= 4 * d * itemsize * granule, (
        "feature dim too large for a resident (D, D) gram accumulator")

    if block_n is None:
        # Size the batch tile from the VMEM budget: 2 inputs x 2 pipeline buffers.
        bn_cap = (avail // (4 * d * itemsize)) // granule * granule
        bn_cap = max(min(bn_cap, 1024), granule)   # >=512 rows already ~85% HBM roofline
        rows_per_core = -(-n // _NUM_CORES)
        block_n = min(bn_cap, _round_up(rows_per_core, granule))
    else:
        block_n = max(granule, _round_up(block_n, granule))

    t = -(-n // (_NUM_CORES * block_n))            # batch tiles per core
    n_padded = _NUM_CORES * t * block_n
    if n_padded != n:
        # Zero rows contribute nothing to sums / grams / (z1 - z2)^2.
        z1 = jnp.pad(z1, ((0, n_padded - n), (0, 0)))
        z2 = jnp.pad(z2, ((0, n_padded - n), (0, 0)))

    f32 = jnp.float32
    g1p, g2p, s1p, s2p, dsqp = pl.pallas_call(
        _vicreg_accum_kernel,
        out_shape=(
            jax.ShapeDtypeStruct((_NUM_CORES, d, d), f32),
            jax.ShapeDtypeStruct((_NUM_CORES, d, d), f32),
            jax.ShapeDtypeStruct((_NUM_CORES, 8, d), f32),
            jax.ShapeDtypeStruct((_NUM_CORES, 8, d), f32),
            jax.ShapeDtypeStruct((_NUM_CORES, 1, d), f32),
        ),
        grid_spec=pltpu.PrefetchScalarGridSpec(
            num_scalar_prefetch=0,
            grid=(_NUM_CORES, t),
            in_specs=[
                pl.BlockSpec((block_n, d), lambda c, i: (c * t + i, 0)),
                pl.BlockSpec((block_n, d), lambda c, i: (c * t + i, 0)),
            ],
            out_specs=(
                pl.BlockSpec((None, d, d), lambda c, i: (c, 0, 0)),
                pl.BlockSpec((None, d, d), lambda c, i: (c, 0, 0)),
                pl.BlockSpec((None, 8, d), lambda c, i: (c, 0, 0)),
                pl.BlockSpec((None, 8, d), lambda c, i: (c, 0, 0)),
                pl.BlockSpec((None, 1, d), lambda c, i: (c, 0, 0)),
            ),
        ),
        compiler_params=pltpu.CompilerParams(
            dimension_semantics=("parallel", "arbitrary"),
            vmem_limit_bytes=int(budget),
        ),
    )(z1, z2)

    # Combine the tiny per-core partials (a few elementwise adds) before the
    # finalize kernel so its VMEM footprint stays at ~2 * D^2 floats.
    g1, g2 = g1p.sum(axis=0), g2p.sum(axis=0)
    s1, s2 = s1p.sum(axis=0), s2p.sum(axis=0)
    dsq = dsqp.sum(axis=0)

    out = pl.pallas_call(
        functools.partial(_vicreg_finalize_kernel, l=l, mu=mu, nu=nu, n_total=n),
        out_shape=jax.ShapeDtypeStruct((1, 1), f32),
        in_specs=[pl.BlockSpec(memory_space=pltpu.MemorySpace.VMEM)] * 5,
        out_specs=pl.BlockSpec(memory_space=pltpu.MemorySpace.SMEM),
        compiler_params=pltpu.CompilerParams(vmem_limit_bytes=int(budget)),
    )(g1, g2, s1, s2, dsq)
    return out[0, 0]


def vicreg_loss_ref(z1, z2, l=25, mu=25, nu=1):
    """Pure-JAX reference mirroring the PyTorch module."""
    z1 = z1.astype(jnp.float32)
    z2 = z2.astype(jnp.float32)
    N, D = z1.shape
    sim = jnp.mean((z1 - z2) ** 2)
    var1 = jnp.var(z1, axis=0, ddof=1)
    var2 = jnp.var(z2, axis=0, ddof=1)
    std_loss = (jnp.mean(jax.nn.relu(1 - jnp.sqrt(var1 + 1e-4)))
                + jnp.mean(jax.nn.relu(1 - jnp.sqrt(var2 + 1e-4))))
    c1 = z1 - z1.mean(axis=0)
    c2 = z2 - z2.mean(axis=0)
    cov1 = c1.T @ c1 / (N - 1)
    cov2 = c2.T @ c2 / (N - 1)
    off = 1.0 - jnp.eye(D, dtype=jnp.float32)
    cov_loss = (jnp.sum((cov1 * off) ** 2) + jnp.sum((cov2 * off) ** 2)) / D
    return l * sim + mu * std_loss + nu * cov_loss


if __name__ == "__main__":
    key = jax.random.PRNGKey(0)
    k1, k2, k3, k4 = jax.random.split(key, 4)

    # Primary check: multi-tile streaming path (grid = (2 cores, 2 tiles/core)).
    n, d = 256, 128
    z1 = jax.random.normal(k1, (n, d), dtype=jnp.float32)
    z2 = z1 + 0.1 * jax.random.normal(k2, (n, d), dtype=jnp.float32)
    loss = jax.block_until_ready(vicreg_loss(z1, z2, block_n=64))
    ref = jax.block_until_ready(vicreg_loss_ref(z1, z2))
    assert jnp.allclose(loss, ref, rtol=1e-4, atol=1e-4), (loss, ref)

    # Secondary check: tiny shape, auto block_n (single tile per core).
    a = jax.random.normal(k3, (64, 32), dtype=jnp.float32)
    b = jax.random.normal(k4, (64, 32), dtype=jnp.float32)
    loss2 = jax.block_until_ready(vicreg_loss(a, b))
    ref2 = jax.block_until_ready(vicreg_loss_ref(a, b))
    assert jnp.allclose(loss2, ref2, rtol=1e-4, atol=1e-4), (loss2, ref2)

    # Ragged batch (N not a multiple of the tile grid): exercises zero-padding.
    loss3 = jax.block_until_ready(vicreg_loss(a[:50], b[:50]))
    ref3 = jax.block_until_ready(vicreg_loss_ref(a[:50], b[:50]))
    assert jnp.allclose(loss3, ref3, rtol=1e-4, atol=1e-4), (loss3, ref3)

    print("KERNEL_OK")
</pallas_src>

<mosaic_0001>
module attributes {stable_mosaic.version = 11 : i64} {
  func.func @_vicreg_accum_kernel(%arg0: i32, %arg1: i32, %arg2: memref<64x128xf32, #tpu.memory_space<vmem>>, %arg3: memref<64x128xf32, #tpu.memory_space<vmem>>, %arg4: memref<1x128x128xf32, #tpu.memory_space<vmem>>, %arg5: memref<1x128x128xf32, #tpu.memory_space<vmem>>, %arg6: memref<1x8x128xf32, #tpu.memory_space<vmem>>, %arg7: memref<1x8x128xf32, #tpu.memory_space<vmem>>, %arg8: memref<1x1x128xf32, #tpu.memory_space<vmem>>) attributes {dimension_semantics = [#tpu.dimension_semantics<parallel>, #tpu.dimension_semantics<arbitrary>], iteration_bounds = array<i64: 2, 2>, scalar_prefetch = 0 : i64, scratch_operands = 0 : i64, tpu.core_type = #tpu.core_type<tc>, window_params = [{transform_indices = @transform_0, window_bounds = array<i64: 64, 128>}, {transform_indices = @transform_1, window_bounds = array<i64: 64, 128>}, {transform_indices = @transform_2, window_bounds = array<i64: 1, 128, 128>}, {transform_indices = @transform_3, window_bounds = array<i64: 1, 128, 128>}, {transform_indices = @transform_4, window_bounds = array<i64: 1, 8, 128>}, {transform_indices = @transform_5, window_bounds = array<i64: 1, 8, 128>}, {transform_indices = @transform_6, window_bounds = array<i64: 1, 1, 128>}]} {
    %c0 = arith.constant 0 : index
    %c0_0 = arith.constant 0 : index
    %0 = vector.load %arg2[%c0, %c0_0] : memref<64x128xf32, #tpu.memory_space<vmem>>, vector<64x128xf32>
    %c0_1 = arith.constant 0 : index
    %c0_2 = arith.constant 0 : index
    %1 = vector.load %arg3[%c0_1, %c0_2] : memref<64x128xf32, #tpu.memory_space<vmem>>, vector<64x128xf32>
    %cst = arith.constant dense<0.000000e+00> : vector<128xf32>
    %2 = vector.multi_reduction <add>, %0, %cst [0] : vector<64x128xf32> to vector<128xf32>
    %3 = vector.shape_cast %2 : vector<128xf32> to vector<1x128xf32>
    %cst_3 = arith.constant dense<0.000000e+00> : vector<128xf32>
    %4 = vector.multi_reduction <add>, %1, %cst_3 [0] : vector<64x128xf32> to vector<128xf32>
    %5 = vector.shape_cast %4 : vector<128xf32> to vector<1x128xf32>
    %6 = arith.subf %0, %1 : vector<64x128xf32>
    %7 = arith.mulf %6, %6 : vector<64x128xf32>
    %cst_4 = arith.constant dense<0.000000e+00> : vector<128xf32>
    %8 = vector.multi_reduction <add>, %7, %cst_4 [0] : vector<64x128xf32> to vector<128xf32>
    %9 = vector.shape_cast %8 : vector<128xf32> to vector<1x128xf32>
    %cst_5 = arith.constant dense<0.000000e+00> : vector<128x128xf32>
    %10 = tpu.matmul %0, %0, %cst_5 {dimension_numbers = #tpu.dot_dimension_numbers<[0], [0], [1], [1], [0, 1, 1, 1], [], []>, precision = #tpu.contract_precision<fp32>} : vector<64x128xf32>, vector<64x128xf32>, vector<128x128xf32> -> vector<128x128xf32>
    %cst_6 = arith.constant dense<0.000000e+00> : vector<128x128xf32>
    %11 = tpu.matmul %1, %1, %cst_6 {dimension_numbers = #tpu.dot_dimension_numbers<[0], [0], [1], [1], [0, 1, 1, 1], [], []>, precision = #tpu.contract_precision<fp32>} : vector<64x128xf32>, vector<64x128xf32>, vector<128x128xf32> -> vector<128x128xf32>
    %c0_i32 = arith.constant 0 : i32
    %12 = arith.cmpi eq, %arg1, %c0_i32 : i32
    %13 = arith.extui %12 : i1 to i32
    %c0_i32_7 = arith.constant 0 : i32
    %14 = arith.cmpi ne, %13, %c0_i32_7 : i32
    scf.if %14 {
      %c0_10 = arith.constant 0 : index
      %c0_11 = arith.constant 0 : index
      %c0_12 = arith.constant 0 : index
      %18 = vector.load %arg4[%c0_10, %c0_11, %c0_12] : memref<1x128x128xf32, #tpu.memory_space<vmem>>, vector<1x128x128xf32>
      %19 = vector.shape_cast %18 : vector<1x128x128xf32> to vector<128x128xf32>
      %20 = vector.shape_cast %10 : vector<128x128xf32> to vector<1x128x128xf32>
      tpu.vector_store %arg4[%c0_10, %c0_11, %c0_12], %20 {strides = array<i32>} : memref<1x128x128xf32, #tpu.memory_space<vmem>>, vector<1x128x128xf32>,
      %c0_13 = arith.constant 0 : index
      %c0_14 = arith.constant 0 : index
      %c0_15 = arith.constant 0 : index
      %21 = vector.load %arg5[%c0_13, %c0_14, %c0_15] : memref<1x128x128xf32, #tpu.memory_space<vmem>>, vector<1x128x128xf32>
      %22 = vector.shape_cast %21 : vector<1x128x128xf32> to vector<128x128xf32>
      %23 = vector.shape_cast %11 : vector<128x128xf32> to vector<1x128x128xf32>
      tpu.vector_store %arg5[%c0_13, %c0_14, %c0_15], %23 {strides = array<i32>} : memref<1x128x128xf32, #tpu.memory_space<vmem>>, vector<1x128x128xf32>,
      %c0_16 = arith.constant 0 : index
      %c0_17 = arith.constant 0 : index
      %c0_18 = arith.constant 0 : index
      %24 = vector.load %arg8[%c0_16, %c0_17, %c0_18] : memref<1x1x128xf32, #tpu.memory_space<vmem>>, vector<1x1x128xf32>
      %25 = vector.shape_cast %24 : vector<1x1x128xf32> to vector<1x128xf32>
      %26 = vector.shape_cast %9 : vector<1x128xf32> to vector<1x1x128xf32>
      tpu.vector_store %arg8[%c0_16, %c0_17, %c0_18], %26 {strides = array<i32>} : memref<1x1x128xf32, #tpu.memory_space<vmem>>, vector<1x1x128xf32>,
      %cst_19 = arith.constant 0.000000e+00 : f32
      %27 = vector.broadcast %cst_19 : f32 to vector<8x128xf32>
      %c0_20 = arith.constant 0 : index
      %c0_21 = arith.constant 0 : index
      %c0_22 = arith.constant 0 : index
      %28 = vector.load %arg6[%c0_20, %c0_21, %c0_22] : memref<1x8x128xf32, #tpu.memory_space<vmem>>, vector<1x8x128xf32>
      %29 = vector.shape_cast %28 : vector<1x8x128xf32> to vector<8x128xf32>
      %30 = vector.shape_cast %27 : vector<8x128xf32> to vector<1x8x128xf32>
      tpu.vector_store %arg6[%c0_20, %c0_21, %c0_22], %30 {strides = array<i32>} : memref<1x8x128xf32, #tpu.memory_space<vmem>>, vector<1x8x128xf32>,
      %cst_23 = arith.constant 0.000000e+00 : f32
      %31 = vector.broadcast %cst_23 : f32 to vector<8x128xf32>
      %c0_24 = arith.constant 0 : index
      %c0_25 = arith.constant 0 : index
      %c0_26 = arith.constant 0 : index
      %32 = vector.load %arg7[%c0_24, %c0_25, %c0_26] : memref<1x8x128xf32, #tpu.memory_space<vmem>>, vector<1x8x128xf32>
      %33 = vector.shape_cast %32 : vector<1x8x128xf32> to vector<8x128xf32>
      %34 = vector.shape_cast %31 : vector<8x128xf32> to vector<1x8x128xf32>
      tpu.vector_store %arg7[%c0_24, %c0_25, %c0_26], %34 {strides = array<i32>} : memref<1x8x128xf32, #tpu.memory_space<vmem>>, vector<1x8x128xf32>,
      %c0_27 = arith.constant 0 : index
      %c0_28 = arith.constant 0 : index
      %c0_29 = arith.constant 0 : index
      %35 = vector.load %arg6[%c0_27, %c0_28, %c0_29] : memref<1x8x128xf32, #tpu.memory_space<vmem>>, vector<1x1x128xf32>
      %36 = vector.shape_cast %35 : vector<1x1x128xf32> to vector<1x128xf32>
      %37 = vector.shape_cast %3 : vector<1x128xf32> to vector<1x1x128xf32>
      tpu.vector_store %arg6[%c0_27, %c0_28, %c0_29], %37 {strides = array<i32>} : memref<1x8x128xf32, #tpu.memory_space<vmem>>, vector<1x1x128xf32>,
      %c0_30 = arith.constant 0 : index
      %c0_31 = arith.constant 0 : index
      %c0_32 = arith.constant 0 : index
      %38 = vector.load %arg7[%c0_30, %c0_31, %c0_32] : memref<1x8x128xf32, #tpu.memory_space<vmem>>, vector<1x1x128xf32>
      %39 = vector.shape_cast %38 : vector<1x1x128xf32> to vector<1x128xf32>
      %40 = vector.shape_cast %5 : vector<1x128xf32> to vector<1x1x128xf32>
      tpu.vector_store %arg7[%c0_30, %c0_31, %c0_32], %40 {strides = array<i32>} : memref<1x8x128xf32, #tpu.memory_space<vmem>>, vector<1x1x128xf32>,
    } else {
    }
    %c0_i32_8 = arith.constant 0 : i32
    %15 = arith.cmpi sgt, %arg1, %c0_i32_8 : i32
    %16 = arith.extui %15 : i1 to i32
    %c0_i32_9 = arith.constant 0 : i32
    %17 = arith.cmpi ne, %16, %c0_i32_9 : i32
    scf.if %17 {
      %c0_10 = arith.constant 0 : index
      %c0_11 = arith.constant 0 : index
      %c0_12 = arith.constant 0 : index
      %18 = vector.load %arg4[%c0_10, %c0_11, %c0_12] : memref<1x128x128xf32, #tpu.memory_space<vmem>>, vector<1x128x128xf32>
      %19 = vector.shape_cast %18 : vector<1x128x128xf32> to vector<128x128xf32>
      %20 = arith.addf %19, %10 : vector<128x128xf32>
      %c0_13 = arith.constant 0 : index
      %c0_14 = arith.constant 0 : index
      %c0_15 = arith.constant 0 : index
      %21 = vector.load %arg4[%c0_13, %c0_14, %c0_15] : memref<1x128x128xf32, #tpu.memory_space<vmem>>, vector<1x128x128xf32>
      %22 = vector.shape_cast %21 : vector<1x128x128xf32> to vector<128x128xf32>
      %23 = vector.shape_cast %20 : vector<128x128xf32> to vector<1x128x128xf32>
      tpu.vector_store %arg4[%c0_13, %c0_14, %c0_15], %23 {strides = array<i32>} : memref<1x128x128xf32, #tpu.memory_space<vmem>>, vector<1x128x128xf32>,
      %c0_16 = arith.constant 0 : index
      %c0_17 = arith.constant 0 : index
      %c0_18 = arith.constant 0 : index
      %24 = vector.load %arg5[%c0_16, %c0_17, %c0_18] : memref<1x128x128xf32, #tpu.memory_space<vmem>>, vector<1x128x128xf32>
      %25 = vector.shape_cast %24 : vector<1x128x128xf32> to vector<128x128xf32>
      %26 = arith.addf %25, %11 : vector<128x128xf32>
      %c0_19 = arith.constant 0 : index
      %c0_20 = arith.constant 0 : index
      %c0_21 = arith.constant 0 : index
      %27 = vector.load %arg5[%c0_19, %c0_20, %c0_21] : memref<1x128x128xf32, #tpu.memory_space<vmem>>, vector<1x128x128xf32>
      %28 = vector.shape_cast %27 : vector<1x128x128xf32> to vector<128x128xf32>
      %29 = vector.shape_cast %26 : vector<128x128xf32> to vector<1x128x128xf32>
      tpu.vector_store %arg5[%c0_19, %c0_20, %c0_21], %29 {strides = array<i32>} : memref<1x128x128xf32, #tpu.memory_space<vmem>>, vector<1x128x128xf32>,
      %c0_22 = arith.constant 0 : index
      %c0_23 = arith.constant 0 : index
      %c0_24 = arith.constant 0 : index
      %30 = vector.load %arg8[%c0_22, %c0_23, %c0_24] : memref<1x1x128xf32, #tpu.memory_space<vmem>>, vector<1x1x128xf32>
      %31 = vector.shape_cast %30 : vector<1x1x128xf32> to vector<1x128xf32>
      %32 = arith.addf %31, %9 : vector<1x128xf32>
      %c0_25 = arith.constant 0 : index
      %c0_26 = arith.constant 0 : index
      %c0_27 = arith.constant 0 : index
      %33 = vector.load %arg8[%c0_25, %c0_26, %c0_27] : memref<1x1x128xf32, #tpu.memory_space<vmem>>, vector<1x1x128xf32>
      %34 = vector.shape_cast %33 : vector<1x1x128xf32> to vector<1x128xf32>
      %35 = vector.shape_cast %32 : vector<1x128xf32> to vector<1x1x128xf32>
      tpu.vector_store %arg8[%c0_25, %c0_26, %c0_27], %35 {strides = array<i32>} : memref<1x1x128xf32, #tpu.memory_space<vmem>>, vector<1x1x128xf32>,
      %c0_28 = arith.constant 0 : index
      %c0_29 = arith.constant 0 : index
      %c0_30 = arith.constant 0 : index
      %36 = vector.load %arg6[%c0_28, %c0_29, %c0_30] : memref<1x8x128xf32, #tpu.memory_space<vmem>>, vector<1x1x128xf32>
      %37 = vector.shape_cast %36 : vector<1x1x128xf32> to vector<1x128xf32>
      %38 = arith.addf %37, %3 : vector<1x128xf32>
      %c0_31 = arith.constant 0 : index
      %c0_32 = arith.constant 0 : index
      %c0_33 = arith.constant 0 : index
      %39 = vector.load %arg6[%c0_31, %c0_32, %c0_33] : memref<1x8x128xf32, #tpu.memory_space<vmem>>, vector<1x1x128xf32>
      %40 = vector.shape_cast %39 : vector<1x1x128xf32> to vector<1x128xf32>
      %41 = vector.shape_cast %38 : vector<1x128xf32> to vector<1x1x128xf32>
      tpu.vector_store %arg6[%c0_31, %c0_32, %c0_33], %41 {strides = array<i32>} : memref<1x8x128xf32, #tpu.memory_space<vmem>>, vector<1x1x128xf32>,
      %c0_34 = arith.constant 0 : index
      %c0_35 = arith.constant 0 : index
      %c0_36 = arith.constant 0 : index
      %42 = vector.load %arg7[%c0_34, %c0_35, %c0_36] : memref<1x8x128xf32, #tpu.memory_space<vmem>>, vector<1x1x128xf32>
      %43 = vector.shape_cast %42 : vector<1x1x128xf32> to vector<1x128xf32>
      %44 = arith.addf %43, %5 : vector<1x128xf32>
      %c0_37 = arith.constant 0 : index
      %c0_38 = arith.constant 0 : index
      %c0_39 = arith.constant 0 : index
      %45 = vector.load %arg7[%c0_37, %c0_38, %c0_39] : memref<1x8x128xf32, #tpu.memory_space<vmem>>, vector<1x1x128xf32>
      %46 = vector.shape_cast %45 : vector<1x1x128xf32> to vector<1x128xf32>
      %47 = vector.shape_cast %44 : vector<1x128xf32> to vector<1x1x128xf32>
      tpu.vector_store %arg7[%c0_37, %c0_38, %c0_39], %47 {strides = array<i32>} : memref<1x8x128xf32, #tpu.memory_space<vmem>>, vector<1x1x128xf32>,
    } else {
    }
    return
  }
  func.func @transform_0(%arg0: i32, %arg1: i32) -> (i32, i32) {
    %c2_i32 = arith.constant 2 : i32
    %0 = arith.muli %arg0, %c2_i32 : i32
    %1 = arith.addi %0, %arg1 : i32
    %c0_i32 = arith.constant 0 : i32
    %c0_i32_0 = arith.constant 0 : i32
    return %1, %c0_i32 : i32, i32
  }
  func.func @transform_1(%arg0: i32, %arg1: i32) -> (i32, i32) {
    %c2_i32 = arith.constant 2 : i32
    %0 = arith.muli %arg0, %c2_i32 : i32
    %1 = arith.addi %0, %arg1 : i32
    %c0_i32 = arith.constant 0 : i32
    %c0_i32_0 = arith.constant 0 : i32
    return %1, %c0_i32 : i32, i32
  }
  func.func @transform_2(%arg0: i32, %arg1: i32) -> (i32, i32, i32) {
    %c0_i32 = arith.constant 0 : i32
    %c0_i32_0 = arith.constant 0 : i32
    %c0_i32_1 = arith.constant 0 : i32
    return %arg0, %c0_i32, %c0_i32_0 : i32, i32, i32
  }
  func.func @transform_3(%arg0: i32, %arg1: i32) -> (i32, i32, i32) {
    %c0_i32 = arith.constant 0 : i32
    %c0_i32_0 = arith.constant 0 : i32
    %c0_i32_1 = arith.constant 0 : i32
    return %arg0, %c0_i32, %c0_i32_0 : i32, i32, i32
  }
  func.func @transform_4(%arg0: i32, %arg1: i32) -> (i32, i32, i32) {
    %c0_i32 = arith.constant 0 : i32
    %c0_i32_0 = arith.constant 0 : i32
    %c0_i32_1 = arith.constant 0 : i32
    return %arg0, %c0_i32, %c0_i32_0 : i32, i32, i32
  }
  func.func @transform_5(%arg0: i32, %arg1: i32) -> (i32, i32, i32) {
    %c0_i32 = arith.constant 0 : i32
    %c0_i32_0 = arith.constant 0 : i32
    %c0_i32_1 = arith.constant 0 : i32
    return %arg0, %c0_i32, %c0_i32_0 : i32, i32, i32
  }
  func.func @transform_6(%arg0: i32, %arg1: i32) -> (i32, i32, i32) {
    %c0_i32 = arith.constant 0 : i32
    %c0_i32_0 = arith.constant 0 : i32
    %c0_i32_1 = arith.constant 0 : i32
    return %arg0, %c0_i32, %c0_i32_0 : i32, i32, i32
  }
}

</mosaic_0001>

<llo_original>
// kernel: tpu_custom_call.1
$region0: #{tpu_custom_call.1}
  #allocation0 [shape = 'u32[]', space=smem, size = 0x4, offset = 0x4, fixed_abs, tag = 'smem constant byte address 0x4 - core index']
  #allocation1 [shape = 'u32[72,128]{1,0:T(1,128)}', space=vmem, size = 0x9000, scoped, tag = 'internal scratch']
  %s0 = inlined_call_operand.hbm [shape: f32[256,128], index: 0, kind: input, shape index: {}]
  %s1 = inlined_call_operand.hbm [shape: f32[256,128], index: 1, kind: input, shape index: {}]
  %s2 = inlined_call_operand.hbm [shape: f32[2,128,128], index: 2, kind: output, shape index: {0}]
  %s3 = inlined_call_operand.hbm [shape: f32[2,128,128], index: 3, kind: output, shape index: {1}]
  %s4 = inlined_call_operand.hbm [shape: f32[2,8,128], index: 4, kind: output, shape index: {2}]
  %s5 = inlined_call_operand.hbm [shape: f32[2,8,128], index: 5, kind: output, shape index: {3}]
  %s6 = inlined_call_operand.hbm [shape: f32[2,1,128], index: 6, kind: output, shape index: {4}]
  %7 = xla_tuple %s2, %s3, %s4, %s5, %s6
  %s8 = sld [smem:[#allocation0]]
  $region89: #{tpu_custom_call.1} parent=0
    _
  %s10 = ssub.s32 1, %s8
  %s11 = scalar_select 0, %s10, %s8
  $region1: #{tpu_custom_call.1} parent=0
    #allocation2 [shape = 'u8[65536]{0}', space=vmem, size = 0x10000, scoped, tag = 'input window, operand 0']
    #allocation3 [shape = 's32[2]{0}', space=sflag, size = 0x8, scoped, tag = 'scoped memory for tpu_custom_call.1']
    #allocation4 [shape = 's32[2]{0}', space=sflag, size = 0x8, scoped, tag = 'scoped memory for tpu_custom_call.1']
    #allocation5 [shape = 'u8[65536]{0}', space=vmem, size = 0x10000, scoped, tag = 'input window, operand 1']
    #allocation6 [shape = 's32[2]{0}', space=sflag, size = 0x8, scoped, tag = 'scoped memory for tpu_custom_call.1']
    #allocation7 [shape = 'u8[131072]{0}', space=vmem, size = 0x20000, scoped, tag = 'output window, operand 0']
    #allocation8 [shape = 'u8[131072]{0}', space=vmem, size = 0x20000, scoped, tag = 'output window, operand 1']
    #allocation9 [shape = 's32[2]{0}', space=sflag, size = 0x8, scoped, tag = 'scoped memory for tpu_custom_call.1']
    #allocation10 [shape = 'u8[8192]{0}', space=vmem, size = 0x2000, scoped, tag = 'output window, operand 2']
    #allocation11 [shape = 'u8[8192]{0}', space=vmem, size = 0x2000, scoped, tag = 'output window, operand 3']
    #allocation12 [shape = 's32[2]{0}', space=sflag, size = 0x8, scoped, tag = 'scoped memory for tpu_custom_call.1']
    #allocation13 [shape = 'u8[1024]{0}', space=vmem, size = 0x400, scoped, tag = 'output window, operand 4']
    %12 = vsyncpa [#allocation3], 0
    %s13 = scalar_lea.sflag [#allocation3], 1
    %14 = vsyncpa %s13, 0
    %15 = vsyncpa [#allocation6], 0
    %s16 = scalar_lea.sflag [#allocation6], 1
    %17 = vsyncpa %s16, 0
    %18 = vsyncpa [#allocation4], 0
    %s19 = scalar_lea.sflag [#allocation4], 1
    %20 = vsyncpa %s19, 0
    %21 = vsyncpa [#allocation9], 0
    %s22 = scalar_lea.sflag [#allocation9], 1
    %23 = vsyncpa %s22, 0
    %24 = vsyncpa [#allocation12], 0
    %s25 = scalar_lea.sflag [#allocation12], 1
    %26 = vsyncpa %s25, 0
    loop: start=0, step=1, limit=6
    $region2: #{tpu_custom_call.1} parent=1 // loop_pre_header
      _
    $region3: #{tpu_custom_call.1} parent=1 // loop_header
      %s28 = sphi 0, %s32
      %p29 = scmp.ge.s32.totalorder %s28, 6
      %s35 = sphi 0, %s47
      %s36 = sphi 0, %s43
      %s37 = sphi 0, %s35
      %s38 = sphi 0, %s36
      %s39 = sphi 0, %s37
      %s40 = sphi 0, %s38
      %s54 = sphi 0, %s56
      %s57 = sphi 0, %s54
      %s58 = sphi 0, %s57
      %s74 = sphi 0, %s58
      %s84 = sphi 0, %s86
      %s87 = sphi 0, %s84
      %s88 = sphi 0, %s87
      %s104 = sphi 0, %s88
      %s110 = sphi 0, %s112
      %s113 = sphi 0, %s110
      %s114 = sphi 0, %s113
      %s130 = sphi 0, %s114
      %s136 = sphi 0, %s138
      %s139 = sphi 0, %s136
      %s140 = sphi 0, %s139
      %s156 = sphi 0, %s140
      %s162 = sphi 0, %s164
      %s165 = sphi 0, %s162
      %s166 = sphi 0, %s165
      %s182 = sphi 0, %s166
      %s188 = sphi 0, %s190
      %s191 = sphi 0, %s188
      %s192 = sphi 0, %s191
      %s208 = sphi 0, %s192
      %s214 = sphi 0, %s216
      %s217 = sphi 0, %s214
      %s218 = sphi 0, %s217
      %s234 = sphi 0, %s218
    $region4: #{tpu_custom_call.1} parent=1 // loop_header_branch
      %31 = sbr.rel (%p29) target = $region8
    $region5: #{tpu_custom_call.1} parent=1 // loop_body
      %s33 = ssub.s32 %s28, 1
      %s34 = ssub.s32 %s28, 2
      %s41 = sadd.s32 1, %s36
      %p42 = scmp.ge.s32.totalorder %s41, 2
      %s43 = scalar_select %p42, 0, %s41
      %s44 = sadd.s32 1, %s35
      %s45 = scalar_select %p42, %s44, %s35
      %p46 = scmp.ge.s32.totalorder %s45, 2
      %s47 = scalar_select %p46, 0, %s45
      %s48 = smul.u32 %s35, 2
      %s49 = sadd.s32 %s48, %s36
      %s50 = smul.u32 %s47, 2
      %s51 = sadd.s32 %s50, %s43
      %s52 = ssub.s32 %s49, %s51
      %p53 = scmp.eq.s32.totalorder %s52, 0
      %s55 = sadd.s32 %s54, 1
      %s56 = scalar_select %p53, %s54, %s55
      %p59 = pneg %p53
      %p60 = scmp.eq.s32.totalorder %s28, 3
      %p61 = por %p59, %p60
      %p62 = scmp.ne.s32.totalorder %s54, %s57
      %p63 = scmp.eq.s32.totalorder %s28, 0
      %p64 = por %p62, %p63
      %p65 = scmp.ne.s32.totalorder %s54, %s57
      %p66 = scmp.eq.s32.totalorder %s33, 3
      %p67 = por %p65, %p66
      %p68 = scmp.ne.s32.totalorder %s57, %s58
      %p69 = scmp.eq.s32.totalorder %s33, 0
      %p70 = por %p68, %p69
      %p71 = scmp.ne.s32.totalorder %s57, %s58
      %p72 = scmp.eq.s32.totalorder %s34, 3
      %p73 = por %p71, %p72
      %p75 = scmp.ne.s32.totalorder %s58, %s74
      %p76 = scmp.eq.s32.totalorder %s34, 0
      %p77 = por %p75, %p76
      %s78 = smul.u32 %s35, 2
      %s79 = sadd.s32 %s78, %s36
      %s80 = smul.u32 %s47, 2
      %s81 = sadd.s32 %s80, %s43
      %s82 = ssub.s32 %s79, %s81
      %p83 = scmp.eq.s32.totalorder %s82, 0
      %s85 = sadd.s32 %s84, 1
      %s86 = scalar_select %p83, %s84, %s85
      %p89 = pneg %p83
      %p90 = scmp.eq.s32.totalorder %s28, 3
      %p91 = por %p89, %p90
      %p92 = scmp.ne.s32.totalorder %s84, %s87
      %p93 = scmp.eq.s32.totalorder %s28, 0
      %p94 = por %p92, %p93
      %p95 = scmp.ne.s32.totalorder %s84, %s87
      %p96 = scmp.eq.s32.totalorder %s33, 3
      %p97 = por %p95, %p96
      %p98 = scmp.ne.s32.totalorder %s87, %s88
      %p99 = scmp.eq.s32.totalorder %s33, 0
      %p100 = por %p98, %p99
      %p101 = scmp.ne.s32.totalorder %s87, %s88
      %p102 = scmp.eq.s32.totalorder %s34, 3
      %p103 = por %p101, %p102
      %p105 = scmp.ne.s32.totalorder %s88, %s104
      %p106 = scmp.eq.s32.totalorder %s34, 0
      %p107 = por %p105, %p106
      %s108 = ssub.s32 %s35, %s47
      %p109 = scmp.eq.s32.totalorder %s108, 0
      %s111 = sadd.s32 %s110, 1
      %s112 = scalar_select %p109, %s110, %s111
      %p115 = pneg %p109
      %p116 = scmp.eq.s32.totalorder %s28, 3
      %p117 = por %p115, %p116
      %p118 = scmp.ne.s32.totalorder %s110, %s113
      %p119 = scmp.eq.s32.totalorder %s28, 0
      %p120 = por %p118, %p119
      %p121 = scmp.ne.s32.totalorder %s110, %s113
      %p122 = scmp.eq.s32.totalorder %s33, 3
      %p123 = por %p121, %p122
      %p124 = scmp.ne.s32.totalorder %s113, %s114
      %p125 = scmp.eq.s32.totalorder %s33, 0
      %p126 = por %p124, %p125
      %p127 = scmp.ne.s32.totalorder %s113, %s114
      %p128 = scmp.eq.s32.totalorder %s34, 3
      %p129 = por %p127, %p128
      %p131 = scmp.ne.s32.totalorder %s114, %s130
      %p132 = scmp.eq.s32.totalorder %s34, 0
      %p133 = por %p131, %p132
      %s134 = ssub.s32 %s35, %s47
      %p135 = scmp.eq.s32.totalorder %s134, 0
      %s137 = sadd.s32 %s136, 1
      %s138 = scalar_select %p135, %s136, %s137
      %p141 = pneg %p135
      %p142 = scmp.eq.s32.totalorder %s28, 3
      %p143 = por %p141, %p142
      %p144 = scmp.ne.s32.totalorder %s136, %s139
      %p145 = scmp.eq.s32.totalorder %s28, 0
      %p146 = por %p144, %p145
      %p147 = scmp.ne.s32.totalorder %s136, %s139
      %p148 = scmp.eq.s32.totalorder %s33, 3
      %p149 = por %p147, %p148
      %p150 = scmp.ne.s32.totalorder %s139, %s140
      %p151 = scmp.eq.s32.totalorder %s33, 0
      %p152 = por %p150, %p151
      %p153 = scmp.ne.s32.totalorder %s139, %s140
      %p154 = scmp.eq.s32.totalorder %s34, 3
      %p155 = por %p153, %p154
      %p157 = scmp.ne.s32.totalorder %s140, %s156
      %p158 = scmp.eq.s32.totalorder %s34, 0
      %p159 = por %p157, %p158
      %s160 = ssub.s32 %s35, %s47
      %p161 = scmp.eq.s32.totalorder %s160, 0
      %s163 = sadd.s32 %s162, 1
      %s164 = scalar_select %p161, %s162, %s163
      %p167 = pneg %p161
      %p168 = scmp.eq.s32.totalorder %s28, 3
      %p169 = por %p167, %p168
      %p170 = scmp.ne.s32.totalorder %s162, %s165
      %p171 = scmp.eq.s32.totalorder %s28, 0
      %p172 = por %p170, %p171
      %p173 = scmp.ne.s32.totalorder %s162, %s165
      %p174 = scmp.eq.s32.totalorder %s33, 3
      %p175 = por %p173, %p174
      %p176 = scmp.ne.s32.totalorder %s165, %s166
      %p177 = scmp.eq.s32.totalorder %s33, 0
      %p178 = por %p176, %p177
      %p179 = scmp.ne.s32.totalorder %s165, %s166
      %p180 = scmp.eq.s32.totalorder %s34, 3
      %p181 = por %p179, %p180
      %p183 = scmp.ne.s32.totalorder %s166, %s182
      %p184 = scmp.eq.s32.totalorder %s34, 0
      %p185 = por %p183, %p184
      %s186 = ssub.s32 %s35, %s47
      %p187 = scmp.eq.s32.totalorder %s186, 0
      %s189 = sadd.s32 %s188, 1
      %s190 = scalar_select %p187, %s188, %s189
      %p193 = pneg %p187
      %p194 = scmp.eq.s32.totalorder %s28, 3
      %p195 = por %p193, %p194
      %p196 = scmp.ne.s32.totalorder %s188, %s191
      %p197 = scmp.eq.s32.totalorder %s28, 0
      %p198 = por %p196, %p197
      %p199 = scmp.ne.s32.totalorder %s188, %s191
      %p200 = scmp.eq.s32.totalorder %s33, 3
      %p201 = por %p199, %p200
      %p202 = scmp.ne.s32.totalorder %s191, %s192
      %p203 = scmp.eq.s32.totalorder %s33, 0
      %p204 = por %p202, %p203
      %p205 = scmp.ne.s32.totalorder %s191, %s192
      %p206 = scmp.eq.s32.totalorder %s34, 3
      %p207 = por %p205, %p206
      %p209 = scmp.ne.s32.totalorder %s192, %s208
      %p210 = scmp.eq.s32.totalorder %s34, 0
      %p211 = por %p209, %p210
      %s212 = ssub.s32 %s35, %s47
      %p213 = scmp.eq.s32.totalorder %s212, 0
      %s215 = sadd.s32 %s214, 1
      %s216 = scalar_select %p213, %s214, %s215
      %p219 = pneg %p213
      %p220 = scmp.eq.s32.totalorder %s28, 3
      %p221 = por %p219, %p220
      %p222 = scmp.ne.s32.totalorder %s214, %s217
      %p223 = scmp.eq.s32.totalorder %s28, 0
      %p224 = por %p222, %p223
      %p225 = scmp.ne.s32.totalorder %s214, %s217
      %p226 = scmp.eq.s32.totalorder %s33, 3
      %p227 = por %p225, %p226
      %p228 = scmp.ne.s32.totalorder %s217, %s218
      %p229 = scmp.eq.s32.totalorder %s33, 0
      %p230 = por %p228, %p229
      %p231 = scmp.ne.s32.totalorder %s217, %s218
      %p232 = scmp.eq.s32.totalorder %s34, 3
      %p233 = por %p231, %p232
      %p235 = scmp.ne.s32.totalorder %s218, %s234
      %p236 = scmp.eq.s32.totalorder %s34, 0
      %p237 = por %p235, %p236
      %p238 = scmp.le.s32.totalorder 1, %s28
      %p239 = scmp.lt.s32.totalorder %s28, 5
      %p240 = pnand %p238, %p239
      %p241 = pneg %p240
      // Predicated region
      $region9: #{tpu_custom_call.1} parent=5 // pred_check
        _
      $region10: #{tpu_custom_call.1} parent=5 // pred_check_branch
        %243 = sbr.rel (%p240) target = $region12
      $region11: #{tpu_custom_call.1} parent=5 // pred_region
        %s244 = ssub.s32 %s28, 1
      $region12: #{tpu_custom_call.1} parent=5 // pred_fallthru
        _
      %p245 = scmp.lt.s32.totalorder %s28, 4
      // Predicated region
      $region13: #{tpu_custom_call.1} parent=5 // pred_check
        %p246 = pneg %p245
      $region14: #{tpu_custom_call.1} parent=5 // pred_check_branch
        %248 = sbr.rel (%p246) target = $region16
      $region15: #{tpu_custom_call.1} parent=5 // pred_region
        // Predicated region
        $region17: #{tpu_custom_call.1} parent=15 // pred_check
          %p249 = pneg %p64
        $region18: #{tpu_custom_call.1} parent=15 // pred_check_branch
          %251 = sbr.rel (%p249) target = $region20
        $region19: #{tpu_custom_call.1} parent=15 // pred_region
          %s252 = sand.u32 %s54, 1
          %s253 = scalar_lea.sflag [#allocation3], %s252
          %s254 = sand.u32 %s54, 1
          %s255 = smul.addr %s254, 64
          %s256 = scalar_lea.vmem [#allocation2], %s255
          %s257 = smul.u32 %s35, 2
          %s258 = sadd.s32 %s257, %s36
          %s259 = smul.u32 8, %s258
          %261 = vsyncadd %s253, 0
          %s262 = smul.addr %s259, 8
          %s263 = scalar_lea.hbm %s0, %s262
          %s264 = sshll.u32 %s263, 4
          %s265 = int_to_ptr.hbm [resolvable:$true] %s264
          %s266 = sshll.u32 %s256, 4
          %s267 = int_to_ptr.vmem [resolvable:$true] %s266
          %272 = dma.hbm_to_vmem [thread:$0]  %s265, 1024, %s267, %s253, 128, 128, 8
        $region20: #{tpu_custom_call.1} parent=15 // pred_fallthru
          _
        // Predicated region
        $region21: #{tpu_custom_call.1} parent=15 // pred_check
          %p273 = pneg %p94
        $region22: #{tpu_custom_call.1} parent=15 // pred_check_branch
          %275 = sbr.rel (%p273) target = $region24
        $region23: #{tpu_custom_call.1} parent=15 // pred_region
          %s276 = sand.u32 %s84, 1
          %s277 = scalar_lea.sflag [#allocation6], %s276
          %s278 = sand.u32 %s84, 1
          %s279 = smul.addr %s278, 64
          %s280 = scalar_lea.vmem [#allocation5], %s279
          %s281 = smul.u32 %s35, 2
          %s282 = sadd.s32 %s281, %s36
          %s283 = smul.u32 8, %s282
          %285 = vsyncadd %s277, 0
          %s286 = smul.addr %s283, 8
          %s287 = scalar_lea.hbm %s1, %s286
          %s288 = sshll.u32 %s287, 4
          %s289 = int_to_ptr.hbm [resolvable:$true] %s288
          %s290 = sshll.u32 %s280, 4
          %s291 = int_to_ptr.vmem [resolvable:$true] %s290
          %296 = dma.hbm_to_vmem [thread:$0]  %s289, 1024, %s291, %s277, 128, 128, 8
        $region24: #{tpu_custom_call.1} parent=15 // pred_fallthru
          _
      $region16: #{tpu_custom_call.1} parent=5 // pred_fallthru
        _
      %p297 = scmp.le.s32.totalorder 1, %s28
      %p298 = scmp.lt.s32.totalorder %s28, 5
      %p299 = pnand %p297, %p298
      %p300 = pneg %p299
      // Predicated region
      $region25: #{tpu_custom_call.1} parent=5 // pred_check
        _
      $region26: #{tpu_custom_call.1} parent=5 // pred_check_branch
        %302 = sbr.rel (%p299) target = $region28
      $region27: #{tpu_custom_call.1} parent=5 // pred_region
        %s303 = ssub.s32 %s28, 1
        %s304 = sand.u32 %s57, 1
        %s305 = scalar_lea.sflag [#allocation3], %s304
        %s306 = sand.u32 %s57, 1
        %s307 = smul.addr %s306, 64
        %s308 = scalar_lea.vmem [#allocation2], %s307
        // Predicated region
        $region29: #{tpu_custom_call.1} parent=27 // pred_check
          %p309 = pneg %p70
        $region30: #{tpu_custom_call.1} parent=27 // pred_check_branch
          %311 = sbr.rel (%p309) target = $region32
        $region31: #{tpu_custom_call.1} parent=27 // pred_region
          %313 = dma.done %s305, 1024
        $region32: #{tpu_custom_call.1} parent=27 // pred_fallthru
          _
        %s314 = sand.u32 %s87, 1
        %s315 = scalar_lea.sflag [#allocation6], %s314
        %s316 = sand.u32 %s87, 1
        %s317 = smul.addr %s316, 64
        %s318 = scalar_lea.vmem [#allocation5], %s317
        // Predicated region
        $region33: #{tpu_custom_call.1} parent=27 // pred_check
          %p319 = pneg %p100
        $region34: #{tpu_custom_call.1} parent=27 // pred_check_branch
          %321 = sbr.rel (%p319) target = $region36
        $region35: #{tpu_custom_call.1} parent=27 // pred_region
          %323 = dma.done %s315, 1024
        $region36: #{tpu_custom_call.1} parent=27 // pred_fallthru
          _
        %s324 = sand.u32 %s57, 1
        %s325 = scalar_lea.sflag [#allocation3], %s324
        %s326 = sand.u32 %s57, 1
        %s327 = smul.addr %s326, 64
        %s328 = scalar_lea.vmem [#allocation2], %s327
        %p329 = pneg %p70
        %p330 = pneg %p67
        %s331 = sand.u32 %s87, 1
        %s332 = scalar_lea.sflag [#allocation6], %s331
        %s333 = sand.u32 %s87, 1
        %s334 = smul.addr %s333, 64
        %s335 = scalar_lea.vmem [#allocation5], %s334
        %p336 = pneg %p100
        %p337 = pneg %p97
        %p338 = pneg %p126
        %p339 = pneg %p123
        %s340 = sand.u32 %s113, 1
        %s341 = scalar_lea.sflag [#allocation4], %s340
        %s342 = sand.u32 %s113, 1
        %s343 = smul.addr %s342, 128
        %s344 = scalar_lea.vmem [#allocation7], %s343
        %p345 = pneg %p152
        %p346 = pneg %p149
        %s347 = sand.u32 %s33, 1
        %s348 = scalar_lea.sflag [#allocation9], %s347
        %s349 = sand.u32 %s139, 1
        %s350 = smul.addr %s349, 128
        %s351 = scalar_lea.vmem [#allocation8], %s350
        %p352 = pneg %p178
        %p353 = pneg %p175
        %s354 = sand.u32 %s33, 1
        %s355 = scalar_lea.sflag [#allocation9], %s354
        %s356 = sand.u32 %s165, 1
        %s357 = smul.addr %s356, 8
        %s358 = scalar_lea.vmem [#allocation10], %s357
        %p359 = pneg %p204
        %p360 = pneg %p201
        %s361 = sand.u32 %s33, 1
        %s362 = scalar_lea.sflag [#allocation12], %s361
        %s363 = sand.u32 %s191, 1
        %s364 = smul.addr %s363, 8
        %s365 = scalar_lea.vmem [#allocation11], %s364
        %p366 = pneg %p230
        %p367 = pneg %p227
        %s368 = sand.u32 %s33, 1
        %s369 = scalar_lea.sflag [#allocation12], %s368
        %s370 = sand.u32 %s217, 1
        %s371 = scalar_lea.vmem [#allocation13], %s370
        %s372 = smul.u32 %s37, 2
        %s373 = sadd.s32 %s372, %s38
        %s374 = smul.u32 8, %s373
        %s375 = smul.u32 %s37, 2
        %s376 = sadd.s32 %s375, %s38
        %s377 = smul.u32 8, %s376
        %v378 = vld [vmem:[%s308] sm:$0xff]
        %v379 = vld [vmem:[%s308 + $0x8] sm:$0xff]
        %v380 = vld [vmem:[%s308 + $0x10] sm:$0xff]
        %v381 = vld [vmem:[%s308 + $0x18] sm:$0xff]
        %v382 = vld [vmem:[%s308 + $0x20] sm:$0xff]
        %v383 = vld [vmem:[%s308 + $0x28] sm:$0xff]
        %v384 = vld [vmem:[%s308 + $0x30] sm:$0xff]
        %v385 = vld [vmem:[%s308 + $0x38] sm:$0xff]
        %v386 = vld [vmem:[%s318] sm:$0xff]
        %v387 = vld [vmem:[%s318 + $0x8] sm:$0xff]
        %v388 = vld [vmem:[%s318 + $0x10] sm:$0xff]
        %v389 = vld [vmem:[%s318 + $0x18] sm:$0xff]
        %v390 = vld [vmem:[%s318 + $0x20] sm:$0xff]
        %v391 = vld [vmem:[%s318 + $0x28] sm:$0xff]
        %v392 = vld [vmem:[%s318 + $0x30] sm:$0xff]
        %v393 = vld [vmem:[%s318 + $0x38] sm:$0xff]
        %v394 = vadd.f32 %v378, %v379
        %v395 = vadd.f32 %v394, %v380
        %v396 = vadd.f32 %v395, %v381
        %v397 = vadd.f32 %v396, %v382
        %v398 = vadd.f32 %v397, %v383
        %v399 = vadd.f32 %v398, %v384
        %v400 = vadd.f32 %v399, %v385
        %v401 = vrot.slane %v400, 4
        %v402 = vadd.f32 %v400, %v401
        %v403 = vrot.slane %v402, 2
        %v404 = vadd.f32 %v402, %v403
        %v405 = vrot.slane %v404, 1
        %v406 = vadd.f32 %v404, %v405
        %v407 = vadd.f32 %v386, %v387
        %v408 = vadd.f32 %v407, %v388
        %v409 = vadd.f32 %v408, %v389
        %v410 = vadd.f32 %v409, %v390
        %v411 = vadd.f32 %v410, %v391
        %v412 = vadd.f32 %v411, %v392
        %v413 = vadd.f32 %v412, %v393
        %v414 = vrot.slane %v413, 4
        %v415 = vadd.f32 %v413, %v414
        %v416 = vrot.slane %v415, 2
        %v417 = vadd.f32 %v415, %v416
        %v418 = vrot.slane %v417, 1
        %v419 = vadd.f32 %v417, %v418
        %v420 = vsub.f32 %v378, %v386
        %v421 = vsub.f32 %v379, %v387
        %v422 = vsub.f32 %v380, %v388
        %v423 = vsub.f32 %v381, %v389
        %v424 = vsub.f32 %v382, %v390
        %v425 = vsub.f32 %v383, %v391
        %v426 = vsub.f32 %v384, %v392
        %v427 = vsub.f32 %v385, %v393
        %v428 = vmul.f32 %v420, %v420
        %v429 = vmul.f32 %v421, %v421
        %v430 = vmul.f32 %v422, %v422
        %v431 = vmul.f32 %v423, %v423
        %v432 = vmul.f32 %v424, %v424
        %v433 = vmul.f32 %v425, %v425
        %v434 = vmul.f32 %v426, %v426
        %v435 = vmul.f32 %v427, %v427
        %v436 = vadd.f32 %v428, %v429
        %v437 = vadd.f32 %v436, %v430
        %v438 = vadd.f32 %v437, %v431
        %v439 = vadd.f32 %v438, %v432
        %v440 = vadd.f32 %v439, %v433
        %v441 = vadd.f32 %v440, %v434
        %v442 = vadd.f32 %v441, %v435
        %v443 = vrot.slane %v442, 4
        %v444 = vadd.f32 %v442, %v443
        %v445 = vrot.slane %v444, 2
        %v446 = vadd.f32 %v444, %v445
        %v447 = vrot.slane %v446, 1
        %v448 = vadd.f32 %v446, %v447
        %449 = vxpose.xlu0.b32.start [1/16] %v378, 128
        %450 = vxpose.xlu0.b32.cont [2/16] %v379, 128
        %451 = vxpose.xlu0.b32.cont [3/16] %v380, 128
        %452 = vxpose.xlu0.b32.cont [4/16] %v381, 128
        %453 = vxpose.xlu0.b32.cont [5/16] %v382, 128
        %454 = vxpose.xlu0.b32.cont [6/16] %v383, 128
        %455 = vxpose.xlu0.b32.cont [7/16] %v384, 128
        %456 = vxpose.xlu0.b32.cont [8/16] %v385, 128
        %457 = vxpose.xlu0.b32.cont [9/16] 0.0, 128
        %458 = vxpose.xlu0.b32.cont [10/16] 0.0, 128
        %459 = vxpose.xlu0.b32.cont [11/16] 0.0, 128
        %460 = vxpose.xlu0.b32.cont [12/16] 0.0, 128
        %461 = vxpose.xlu0.b32.cont [13/16] 0.0, 128
        %462 = vxpose.xlu0.b32.cont [14/16] 0.0, 128
        %463 = vxpose.xlu0.b32.cont [15/16] 0.0, 128
        %464 = vxpose.xlu0.b32.end [16/16] 0.0, 128
        %v465 = vpop.trf.xlu0
        %v466 = vpop.trf.xlu0
        %v467 = vpop.trf.xlu0
        %v468 = vpop.trf.xlu0
        %v469 = vpop.trf.xlu0
        %v470 = vpop.trf.xlu0
        %v471 = vpop.trf.xlu0
        %v472 = vpop.trf.xlu0
        %v473 = vpop.trf.xlu0
        %v474 = vpop.trf.xlu0
        %v475 = vpop.trf.xlu0
        %v476 = vpop.trf.xlu0
        %v477 = vpop.trf.xlu0
        %v478 = vpop.trf.xlu0
        %v479 = vpop.trf.xlu0
        %v480 = vpop.trf.xlu0
        %vm481 = vcmask 523264
        %v483 = vsel %vm481, %v465, 0
        %v486 = vsel %vm481, %v466, 0
        %v489 = vsel %vm481, %v467, 0
        %v492 = vsel %vm481, %v468, 0
        %v495 = vsel %vm481, %v469, 0
        %v498 = vsel %vm481, %v470, 0
        %v501 = vsel %vm481, %v471, 0
        %v504 = vsel %vm481, %v472, 0
        %v507 = vsel %vm481, %v473, 0
        %v510 = vsel %vm481, %v474, 0
        %v513 = vsel %vm481, %v475, 0
        %v516 = vsel %vm481, %v476, 0
        %v519 = vsel %vm481, %v477, 0
        %v522 = vsel %vm481, %v478, 0
        %v525 = vsel %vm481, %v479, 0
        %v528 = vsel %vm481, %v480, 0
        %530 = vmatpush.msra.mxu0 0.0
        %531 = vmatpush.msra.mxu0 0.0
        %532 = vmatpush.msra.mxu0 0.0
        %533 = vmatpush.msra.mxu0 0.0
        %534 = vmatpush.msra.mxu0 0.0
        %535 = vmatpush.msra.mxu0 0.0
        %536 = vmatpush.msra.mxu0 0.0
        %537 = vmatpush.msra.mxu0 0.0
        %v538 = vand.u32 %v385, 4294901760
        %539 = vmatpush.msra.mxu0 %v538
        %v540 = vand.u32 %v384, 4294901760
        %541 = vmatpush.msra.mxu0 %v540
        %v542 = vand.u32 %v383, 4294901760
        %543 = vmatpush.msra.mxu0 %v542
        %v544 = vand.u32 %v382, 4294901760
        %545 = vmatpush.msra.mxu0 %v544
        %v546 = vand.u32 %v381, 4294901760
        %547 = vmatpush.msra.mxu0 %v546
        %v548 = vand.u32 %v380, 4294901760
        %549 = vmatpush.msra.mxu0 %v548
        %v550 = vand.u32 %v379, 4294901760
        %551 = vmatpush.msra.mxu0 %v550
        %v552 = vand.u32 %v378, 4294901760
        %553 = vmatpush.msra.mxu0 %v552
        %v554 = vand.u32 %v483, 4294901760
        %v555 = vsub.f32 %v483, %v554
        %v556 = vand.u32 %v555, 4294901760
        %v557 = vsub.f32 %v555, %v556
        %v558 = vand.u32 %v557, 4294901760
        %559 = vmatmul.f32.gmra.mxu0 %v558
        %v560 = vpop.f32.mrf.mxu0
        %v561 = vadd.f32 0.0, %v560
        %v562 = vand.u32 %v486, 4294901760
        %v563 = vsub.f32 %v486, %v562
        %v564 = vand.u32 %v563, 4294901760
        %v565 = vsub.f32 %v563, %v564
        %v566 = vand.u32 %v565, 4294901760
        %567 = vmatmul.f32.gmra.mxu0 %v566
        %v568 = vpop.f32.mrf.mxu0
        %v569 = vadd.f32 0.0, %v568
        %v570 = vand.u32 %v489, 4294901760
        %v571 = vsub.f32 %v489, %v570
        %v572 = vand.u32 %v571, 4294901760
        %v573 = vsub.f32 %v571, %v572
        %v574 = vand.u32 %v573, 4294901760
        %575 = vmatmul.f32.gmra.mxu0 %v574
        %v576 = vpop.f32.mrf.mxu0
        %v577 = vadd.f32 0.0, %v576
        %v578 = vand.u32 %v492, 4294901760
        %v579 = vsub.f32 %v492, %v578
        %v580 = vand.u32 %v579, 4294901760
        %v581 = vsub.f32 %v579, %v580
        %v582 = vand.u32 %v581, 4294901760
        %583 = vmatmul.f32.gmra.mxu0 %v582
        %v584 = vpop.f32.mrf.mxu0
        %v585 = vadd.f32 0.0, %v584
        %v586 = vand.u32 %v495, 4294901760
        %v587 = vsub.f32 %v495, %v586
        %v588 = vand.u32 %v587, 4294901760
        %v589 = vsub.f32 %v587, %v588
        %v590 = vand.u32 %v589, 4294901760
        %591 = vmatmul.f32.gmra.mxu0 %v590
        %v592 = vpop.f32.mrf.mxu0
        %v593 = vadd.f32 0.0, %v592
        %v594 = vand.u32 %v498, 4294901760
        %v595 = vsub.f32 %v498, %v594
        %v596 = vand.u32 %v595, 4294901760
        %v597 = vsub.f32 %v595, %v596
        %v598 = vand.u32 %v597, 4294901760
        %599 = vmatmul.f32.gmra.mxu0 %v598
        %v600 = vpop.f32.mrf.mxu0
        %v601 = vadd.f32 0.0, %v600
        %v602 = vand.u32 %v501, 4294901760
        %v603 = vsub.f32 %v501, %v602
        %v604 = vand.u32 %v603, 4294901760
        %v605 = vsub.f32 %v603, %v604
        %v606 = vand.u32 %v605, 4294901760
        %607 = vmatmul.f32.gmra.mxu0 %v606
        %v608 = vpop.f32.mrf.mxu0
        %v609 = vadd.f32 0.0, %v608
        %v610 = vand.u32 %v504, 4294901760
        %v611 = vsub.f32 %v504, %v610
        %v612 = vand.u32 %v611, 4294901760
        %v613 = vsub.f32 %v611, %v612
        %v614 = vand.u32 %v613, 4294901760
        %615 = vmatmul.f32.gmra.mxu0 %v614
        %v616 = vpop.f32.mrf.mxu0
        %v617 = vadd.f32 0.0, %v616
        %v618 = vand.u32 %v507, 4294901760
        %v619 = vsub.f32 %v507, %v618
        %v620 = vand.u32 %v619, 4294901760
        %v621 = vsub.f32 %v619, %v620
        %v622 = vand.u32 %v621, 4294901760
        %623 = vmatmul.f32.gmra.mxu0 %v622
        %v624 = vpop.f32.mrf.mxu0
        %v625 = vadd.f32 0.0, %v624
        %v626 = vand.u32 %v510, 4294901760
        %v627 = vsub.f32 %v510, %v626
        %v628 = vand.u32 %v627, 4294901760
        %v629 = vsub.f32 %v627, %v628
        %v630 = vand.u32 %v629, 4294901760
        %631 = vmatmul.f32.gmra.mxu0 %v630
        %v632 = vpop.f32.mrf.mxu0
        %v633 = vadd.f32 0.0, %v632
        %v634 = vand.u32 %v513, 4294901760
        %v635 = vsub.f32 %v513, %v634
        %v636 = vand.u32 %v635, 4294901760
        %v637 = vsub.f32 %v635, %v636
        %v638 = vand.u32 %v637, 4294901760
        %639 = vmatmul.f32.gmra.mxu0 %v638
        %v640 = vpop.f32.mrf.mxu0
        %v641 = vadd.f32 0.0, %v640
        %v642 = vand.u32 %v516, 4294901760
        %v643 = vsub.f32 %v516, %v642
        %v644 = vand.u32 %v643, 4294901760
        %v645 = vsub.f32 %v643, %v644
        %v646 = vand.u32 %v645, 4294901760
        %647 = vmatmul.f32.gmra.mxu0 %v646
        %v648 = vpop.f32.mrf.mxu0
        %v649 = vadd.f32 0.0, %v648
        %v650 = vand.u32 %v519, 4294901760
        %v651 = vsub.f32 %v519, %v650
        %v652 = vand.u32 %v651, 4294901760
        %v653 = vsub.f32 %v651, %v652
        %v654 = vand.u32 %v653, 4294901760
        %655 = vmatmul.f32.gmra.mxu0 %v654
        %v656 = vpop.f32.mrf.mxu0
        %v657 = vadd.f32 0.0, %v656
        %v658 = vand.u32 %v522, 4294901760
        %v659 = vsub.f32 %v522, %v658
        %v660 = vand.u32 %v659, 4294901760
        %v661 = vsub.f32 %v659, %v660
        %v662 = vand.u32 %v661, 4294901760
        %663 = vmatmul.f32.gmra.mxu0 %v662
        %v664 = vpop.f32.mrf.mxu0
        %v665 = vadd.f32 0.0, %v664
        %v666 = vand.u32 %v525, 4294901760
        %v667 = vsub.f32 %v525, %v666
        %v668 = vand.u32 %v667, 4294901760
        %v669 = vsub.f32 %v667, %v668
        %v670 = vand.u32 %v669, 4294901760
        %671 = vmatmul.f32.gmra.mxu0 %v670
        %v672 = vpop.f32.mrf.mxu0
        %v673 = vadd.f32 0.0, %v672
        %v674 = vand.u32 %v528, 4294901760
        %v675 = vsub.f32 %v528, %v674
        %v676 = vand.u32 %v675, 4294901760
        %v677 = vsub.f32 %v675, %v676
        %v678 = vand.u32 %v677, 4294901760
        %679 = vmatmul.f32.gmra.mxu0 %v678
        %v680 = vpop.f32.mrf.mxu0
        %v681 = vadd.f32 0.0, %v680
        %682 = vdwg.mxu0
        %683 = vmatpush.msra.mxu0 0.0
        %684 = vmatpush.msra.mxu0 0.0
        %685 = vmatpush.msra.mxu0 0.0
        %686 = vmatpush.msra.mxu0 0.0
        %687 = vmatpush.msra.mxu0 0.0
        %688 = vmatpush.msra.mxu0 0.0
        %689 = vmatpush.msra.mxu0 0.0
        %690 = vmatpush.msra.mxu0 0.0
        %v691 = vand.u32 %v385, 4294901760
        %v692 = vsub.f32 %v385, %v691
        %v693 = vand.u32 %v692, 4294901760
        %v694 = vsub.f32 %v692, %v693
        %v695 = vand.u32 %v694, 4294901760
        %696 = vmatpush.msra.mxu0 %v695
        %v697 = vand.u32 %v384, 4294901760
        %v698 = vsub.f32 %v384, %v697
        %v699 = vand.u32 %v698, 4294901760
        %v700 = vsub.f32 %v698, %v699
        %v701 = vand.u32 %v700, 4294901760
        %702 = vmatpush.msra.mxu0 %v701
        %v703 = vand.u32 %v383, 4294901760
        %v704 = vsub.f32 %v383, %v703
        %v705 = vand.u32 %v704, 4294901760
        %v706 = vsub.f32 %v704, %v705
        %v707 = vand.u32 %v706, 4294901760
        %708 = vmatpush.msra.mxu0 %v707
        %v709 = vand.u32 %v382, 4294901760
        %v710 = vsub.f32 %v382, %v709
        %v711 = vand.u32 %v710, 4294901760
        %v712 = vsub.f32 %v710, %v711
        %v713 = vand.u32 %v712, 4294901760
        %714 = vmatpush.msra.mxu0 %v713
        %v715 = vand.u32 %v381, 4294901760
        %v716 = vsub.f32 %v381, %v715
        %v717 = vand.u32 %v716, 4294901760
        %v718 = vsub.f32 %v716, %v717
        %v719 = vand.u32 %v718, 4294901760
        %720 = vmatpush.msra.mxu0 %v719
        %v721 = vand.u32 %v380, 4294901760
        %v722 = vsub.f32 %v380, %v721
        %v723 = vand.u32 %v722, 4294901760
        %v724 = vsub.f32 %v722, %v723
        %v725 = vand.u32 %v724, 4294901760
        %726 = vmatpush.msra.mxu0 %v725
        %v727 = vand.u32 %v379, 4294901760
        %v728 = vsub.f32 %v379, %v727
        %v729 = vand.u32 %v728, 4294901760
        %v730 = vsub.f32 %v728, %v729
        %v731 = vand.u32 %v730, 4294901760
        %732 = vmatpush.msra.mxu0 %v731
        %v733 = vand.u32 %v378, 4294901760
        %v734 = vsub.f32 %v378, %v733
        %v735 = vand.u32 %v734, 4294901760
        %v736 = vsub.f32 %v734, %v735
        %v737 = vand.u32 %v736, 4294901760
        %738 = vmatpush.msra.mxu0 %v737
        %v739 = vand.u32 %v483, 4294901760
        %740 = vmatmul.f32.gmra.mxu0 %v739
        %v741 = vpop.f32.mrf.mxu0
        %v742 = vadd.f32 %v561, %v741
        %v743 = vand.u32 %v486, 4294901760
        %744 = vmatmul.f32.gmra.mxu0 %v743
        %v745 = vpop.f32.mrf.mxu0
        %v746 = vadd.f32 %v569, %v745
        %v747 = vand.u32 %v489, 4294901760
        %748 = vmatmul.f32.gmra.mxu0 %v747
        %v749 = vpop.f32.mrf.mxu0
        %v750 = vadd.f32 %v577, %v749
        %v751 = vand.u32 %v492, 4294901760
        %752 = vmatmul.f32.gmra.mxu0 %v751
        %v753 = vpop.f32.mrf.mxu0
        %v754 = vadd.f32 %v585, %v753
        %v755 = vand.u32 %v495, 4294901760
        %756 = vmatmul.f32.gmra.mxu0 %v755
        %v757 = vpop.f32.mrf.mxu0
        %v758 = vadd.f32 %v593, %v757
        %v759 = vand.u32 %v498, 4294901760
        %760 = vmatmul.f32.gmra.mxu0 %v759
        %v761 = vpop.f32.mrf.mxu0
        %v762 = vadd.f32 %v601, %v761
        %v763 = vand.u32 %v501, 4294901760
        %764 = vmatmul.f32.gmra.mxu0 %v763
        %v765 = vpop.f32.mrf.mxu0
        %v766 = vadd.f32 %v609, %v765
        %v767 = vand.u32 %v504, 4294901760
        %768 = vmatmul.f32.gmra.mxu0 %v767
        %v769 = vpop.f32.mrf.mxu0
        %v770 = vadd.f32 %v617, %v769
        %v771 = vand.u32 %v507, 4294901760
        %772 = vmatmul.f32.gmra.mxu0 %v771
        %v773 = vpop.f32.mrf.mxu0
        %v774 = vadd.f32 %v625, %v773
        %v775 = vand.u32 %v510, 4294901760
        %776 = vmatmul.f32.gmra.mxu0 %v775
        %v777 = vpop.f32.mrf.mxu0
        %v778 = vadd.f32 %v633, %v777
        %v779 = vand.u32 %v513, 4294901760
        %780 = vmatmul.f32.gmra.mxu0 %v779
        %v781 = vpop.f32.mrf.mxu0
        %v782 = vadd.f32 %v641, %v781
        %v783 = vand.u32 %v516, 4294901760
        %784 = vmatmul.f32.gmra.mxu0 %v783
        %v785 = vpop.f32.mrf.mxu0
        %v786 = vadd.f32 %v649, %v785
        %v787 = vand.u32 %v519, 4294901760
        %788 = vmatmul.f32.gmra.mxu0 %v787
        %v789 = vpop.f32.mrf.mxu0
        %v790 = vadd.f32 %v657, %v789
        %v791 = vand.u32 %v522, 4294901760
        %792 = vmatmul.f32.gmra.mxu0 %v791
        %v793 = vpop.f32.mrf.mxu0
        %v794 = vadd.f32 %v665, %v793
        %v795 = vand.u32 %v525, 4294901760
        %796 = vmatmul.f32.gmra.mxu0 %v795
        %v797 = vpop.f32.mrf.mxu0
        %v798 = vadd.f32 %v673, %v797
        %v799 = vand.u32 %v528, 4294901760
        %800 = vmatmul.f32.gmra.mxu0 %v799
        %v801 = vpop.f32.mrf.mxu0
        %v802 = vadd.f32 %v681, %v801
        %803 = vdwg.mxu0
        %804 = vmatpush.msra.mxu0 0.0
        %805 = vmatpush.msra.mxu0 0.0
        %806 = vmatpush.msra.mxu0 0.0
        %807 = vmatpush.msra.mxu0 0.0
        %808 = vmatpush.msra.mxu0 0.0
        %809 = vmatpush.msra.mxu0 0.0
        %810 = vmatpush.msra.mxu0 0.0
        %811 = vmatpush.msra.mxu0 0.0
        %v812 = vand.u32 %v385, 4294901760
        %v813 = vsub.f32 %v385, %v812
        %814 = vmatpush.msra.mxu0 %v813
        %v815 = vand.u32 %v384, 4294901760
        %v816 = vsub.f32 %v384, %v815
        %817 = vmatpush.msra.mxu0 %v816
        %v818 = vand.u32 %v383, 4294901760
        %v819 = vsub.f32 %v383, %v818
        %820 = vmatpush.msra.mxu0 %v819
        %v821 = vand.u32 %v382, 4294901760
        %v822 = vsub.f32 %v382, %v821
        %823 = vmatpush.msra.mxu0 %v822
        %v824 = vand.u32 %v381, 4294901760
        %v825 = vsub.f32 %v381, %v824
        %826 = vmatpush.msra.mxu0 %v825
        %v827 = vand.u32 %v380, 4294901760
        %v828 = vsub.f32 %v380, %v827
        %829 = vmatpush.msra.mxu0 %v828
        %v830 = vand.u32 %v379, 4294901760
        %v831 = vsub.f32 %v379, %v830
        %832 = vmatpush.msra.mxu0 %v831
        %v833 = vand.u32 %v378, 4294901760
        %v834 = vsub.f32 %v378, %v833
        %835 = vmatpush.msra.mxu0 %v834
        %v836 = vand.u32 %v483, 4294901760
        %v837 = vsub.f32 %v483, %v836
        %838 = vmatmul.f32.gmra.mxu0 %v837
        %v839 = vpop.f32.mrf.mxu0
        %v840 = vadd.f32 %v742, %v839
        %v841 = vand.u32 %v486, 4294901760
        %v842 = vsub.f32 %v486, %v841
        %843 = vmatmul.f32.gmra.mxu0 %v842
        %v844 = vpop.f32.mrf.mxu0
        %v845 = vadd.f32 %v746, %v844
        %v846 = vand.u32 %v489, 4294901760
        %v847 = vsub.f32 %v489, %v846
        %848 = vmatmul.f32.gmra.mxu0 %v847
        %v849 = vpop.f32.mrf.mxu0
        %v850 = vadd.f32 %v750, %v849
        %v851 = vand.u32 %v492, 4294901760
        %v852 = vsub.f32 %v492, %v851
        %853 = vmatmul.f32.gmra.mxu0 %v852
        %v854 = vpop.f32.mrf.mxu0
        %v855 = vadd.f32 %v754, %v854
        %v856 = vand.u32 %v495, 4294901760
        %v857 = vsub.f32 %v495, %v856
        %858 = vmatmul.f32.gmra.mxu0 %v857
        %v859 = vpop.f32.mrf.mxu0
        %v860 = vadd.f32 %v758, %v859
        %v861 = vand.u32 %v498, 4294901760
        %v862 = vsub.f32 %v498, %v861
        %863 = vmatmul.f32.gmra.mxu0 %v862
        %v864 = vpop.f32.mrf.mxu0
        %v865 = vadd.f32 %v762, %v864
        %v866 = vand.u32 %v501, 4294901760
        %v867 = vsub.f32 %v501, %v866
        %868 = vmatmul.f32.gmra.mxu0 %v867
        %v869 = vpop.f32.mrf.mxu0
        %v870 = vadd.f32 %v766, %v869
        %v871 = vand.u32 %v504, 4294901760
        %v872 = vsub.f32 %v504, %v871
        %873 = vmatmul.f32.gmra.mxu0 %v872
        %v874 = vpop.f32.mrf.mxu0
        %v875 = vadd.f32 %v770, %v874
        %v876 = vand.u32 %v507, 4294901760
        %v877 = vsub.f32 %v507, %v876
        %878 = vmatmul.f32.gmra.mxu0 %v877
        %v879 = vpop.f32.mrf.mxu0
        %v880 = vadd.f32 %v774, %v879
        %v881 = vand.u32 %v510, 4294901760
        %v882 = vsub.f32 %v510, %v881
        %883 = vmatmul.f32.gmra.mxu0 %v882
        %v884 = vpop.f32.mrf.mxu0
        %v885 = vadd.f32 %v778, %v884
        %v886 = vand.u32 %v513, 4294901760
        %v887 = vsub.f32 %v513, %v886
        %888 = vmatmul.f32.gmra.mxu0 %v887
        %v889 = vpop.f32.mrf.mxu0
        %v890 = vadd.f32 %v782, %v889
        %v891 = vand.u32 %v516, 4294901760
        %v892 = vsub.f32 %v516, %v891
        %893 = vmatmul.f32.gmra.mxu0 %v892
        %v894 = vpop.f32.mrf.mxu0
        %v895 = vadd.f32 %v786, %v894
        %v896 = vand.u32 %v519, 4294901760
        %v897 = vsub.f32 %v519, %v896
        %898 = vmatmul.f32.gmra.mxu0 %v897
        %v899 = vpop.f32.mrf.mxu0
        %v900 = vadd.f32 %v790, %v899
        %v901 = vand.u32 %v522, 4294901760
        %v902 = vsub.f32 %v522, %v901
        %903 = vmatmul.f32.gmra.mxu0 %v902
        %v904 = vpop.f32.mrf.mxu0
        %v905 = vadd.f32 %v794, %v904
        %v906 = vand.u32 %v525, 4294901760
        %v907 = vsub.f32 %v525, %v906
        %908 = vmatmul.f32.gmra.mxu0 %v907
        %v909 = vpop.f32.mrf.mxu0
        %v910 = vadd.f32 %v798, %v909
        %v911 = vand.u32 %v528, 4294901760
        %v912 = vsub.f32 %v528, %v911
        %913 = vmatmul.f32.gmra.mxu0 %v912
        %v914 = vpop.f32.mrf.mxu0
        %v915 = vadd.f32 %v802, %v914
        %916 = vdwg.mxu0
        %917 = vmatpush.msra.mxu0 0.0
        %918 = vmatpush.msra.mxu0 0.0
        %919 = vmatpush.msra.mxu0 0.0
        %920 = vmatpush.msra.mxu0 0.0
        %921 = vmatpush.msra.mxu0 0.0
        %922 = vmatpush.msra.mxu0 0.0
        %923 = vmatpush.msra.mxu0 0.0
        %924 = vmatpush.msra.mxu0 0.0
        %v925 = vand.u32 %v385, 4294901760
        %926 = vmatpush.msra.mxu0 %v925
        %v927 = vand.u32 %v384, 4294901760
        %928 = vmatpush.msra.mxu0 %v927
        %v929 = vand.u32 %v383, 4294901760
        %930 = vmatpush.msra.mxu0 %v929
        %v931 = vand.u32 %v382, 4294901760
        %932 = vmatpush.msra.mxu0 %v931
        %v933 = vand.u32 %v381, 4294901760
        %934 = vmatpush.msra.mxu0 %v933
        %v935 = vand.u32 %v380, 4294901760
        %936 = vmatpush.msra.mxu0 %v935
        %v937 = vand.u32 %v379, 4294901760
        %938 = vmatpush.msra.mxu0 %v937
        %v939 = vand.u32 %v378, 4294901760
        %940 = vmatpush.msra.mxu0 %v939
        %v941 = vand.u32 %v483, 4294901760
        %v942 = vsub.f32 %v483, %v941
        %v943 = vand.u32 %v942, 4294901760
        %944 = vmatmul.f32.gmra.mxu0 %v943
        %v945 = vpop.f32.mrf.mxu0
        %v946 = vadd.f32 %v840, %v945
        %v947 = vand.u32 %v486, 4294901760
        %v948 = vsub.f32 %v486, %v947
        %v949 = vand.u32 %v948, 4294901760
        %950 = vmatmul.f32.gmra.mxu0 %v949
        %v951 = vpop.f32.mrf.mxu0
        %v952 = vadd.f32 %v845, %v951
        %v953 = vand.u32 %v489, 4294901760
        %v954 = vsub.f32 %v489, %v953
        %v955 = vand.u32 %v954, 4294901760
        %956 = vmatmul.f32.gmra.mxu0 %v955
        %v957 = vpop.f32.mrf.mxu0
        %v958 = vadd.f32 %v850, %v957
        %v959 = vand.u32 %v492, 4294901760
        %v960 = vsub.f32 %v492, %v959
        %v961 = vand.u32 %v960, 4294901760
        %962 = vmatmul.f32.gmra.mxu0 %v961
        %v963 = vpop.f32.mrf.mxu0
        %v964 = vadd.f32 %v855, %v963
        %v965 = vand.u32 %v495, 4294901760
        %v966 = vsub.f32 %v495, %v965
        %v967 = vand.u32 %v966, 4294901760
        %968 = vmatmul.f32.gmra.mxu0 %v967
        %v969 = vpop.f32.mrf.mxu0
        %v970 = vadd.f32 %v860, %v969
        %v971 = vand.u32 %v498, 4294901760
        %v972 = vsub.f32 %v498, %v971
        %v973 = vand.u32 %v972, 4294901760
        %974 = vmatmul.f32.gmra.mxu0 %v973
        %v975 = vpop.f32.mrf.mxu0
        %v976 = vadd.f32 %v865, %v975
        %v977 = vand.u32 %v501, 4294901760
        %v978 = vsub.f32 %v501, %v977
        %v979 = vand.u32 %v978, 4294901760
        %980 = vmatmul.f32.gmra.mxu0 %v979
        %v981 = vpop.f32.mrf.mxu0
        %v982 = vadd.f32 %v870, %v981
        %v983 = vand.u32 %v504, 4294901760
        %v984 = vsub.f32 %v504, %v983
        %v985 = vand.u32 %v984, 4294901760
        %986 = vmatmul.f32.gmra.mxu0 %v985
        %v987 = vpop.f32.mrf.mxu0
        %v988 = vadd.f32 %v875, %v987
        %v989 = vand.u32 %v507, 4294901760
        %v990 = vsub.f32 %v507, %v989
        %v991 = vand.u32 %v990, 4294901760
        %992 = vmatmul.f32.gmra.mxu0 %v991
        %v993 = vpop.f32.mrf.mxu0
        %v994 = vadd.f32 %v880, %v993
        %v995 = vand.u32 %v510, 4294901760
        %v996 = vsub.f32 %v510, %v995
        %v997 = vand.u32 %v996, 4294901760
        %998 = vmatmul.f32.gmra.mxu0 %v997
        %v999 = vpop.f32.mrf.mxu0
        %v1000 = vadd.f32 %v885, %v999
        %v1001 = vand.u32 %v513, 4294901760
        %v1002 = vsub.f32 %v513, %v1001
        %v1003 = vand.u32 %v1002, 4294901760
        %1004 = vmatmul.f32.gmra.mxu0 %v1003
        %v1005 = vpop.f32.mrf.mxu0
        %v1006 = vadd.f32 %v890, %v1005
        %v1007 = vand.u32 %v516, 4294901760
        %v1008 = vsub.f32 %v516, %v1007
        %v1009 = vand.u32 %v1008, 4294901760
        %1010 = vmatmul.f32.gmra.mxu0 %v1009
        %v1011 = vpop.f32.mrf.mxu0
        %v1012 = vadd.f32 %v895, %v1011
        %v1013 = vand.u32 %v519, 4294901760
        %v1014 = vsub.f32 %v519, %v1013
        %v1015 = vand.u32 %v1014, 4294901760
        %1016 = vmatmul.f32.gmra.mxu0 %v1015
        %v1017 = vpop.f32.mrf.mxu0
        %v1018 = vadd.f32 %v900, %v1017
        %v1019 = vand.u32 %v522, 4294901760
        %v1020 = vsub.f32 %v522, %v1019
        %v1021 = vand.u32 %v1020, 4294901760
        %1022 = vmatmul.f32.gmra.mxu0 %v1021
        %v1023 = vpop.f32.mrf.mxu0
        %v1024 = vadd.f32 %v905, %v1023
        %v1025 = vand.u32 %v525, 4294901760
        %v1026 = vsub.f32 %v525, %v1025
        %v1027 = vand.u32 %v1026, 4294901760
        %1028 = vmatmul.f32.gmra.mxu0 %v1027
        %v1029 = vpop.f32.mrf.mxu0
        %v1030 = vadd.f32 %v910, %v1029
        %v1031 = vand.u32 %v528, 4294901760
        %v1032 = vsub.f32 %v528, %v1031
        %v1033 = vand.u32 %v1032, 4294901760
        %1034 = vmatmul.f32.gmra.mxu0 %v1033
        %v1035 = vpop.f32.mrf.mxu0
        %v1036 = vadd.f32 %v915, %v1035
        %1037 = vdwg.mxu0
        %1038 = vmatpush.msra.mxu0 0.0
        %1039 = vmatpush.msra.mxu0 0.0
        %1040 = vmatpush.msra.mxu0 0.0
        %1041 = vmatpush.msra.mxu0 0.0
        %1042 = vmatpush.msra.mxu0 0.0
        %1043 = vmatpush.msra.mxu0 0.0
        %1044 = vmatpush.msra.mxu0 0.0
        %1045 = vmatpush.msra.mxu0 0.0
        %v1046 = vand.u32 %v385, 4294901760
        %v1047 = vsub.f32 %v385, %v1046
        %v1048 = vand.u32 %v1047, 4294901760
        %1049 = vmatpush.msra.mxu0 %v1048
        %v1050 = vand.u32 %v384, 4294901760
        %v1051 = vsub.f32 %v384, %v1050
        %v1052 = vand.u32 %v1051, 4294901760
        %1053 = vmatpush.msra.mxu0 %v1052
        %v1054 = vand.u32 %v383, 4294901760
        %v1055 = vsub.f32 %v383, %v1054
        %v1056 = vand.u32 %v1055, 4294901760
        %1057 = vmatpush.msra.mxu0 %v1056
        %v1058 = vand.u32 %v382, 4294901760
        %v1059 = vsub.f32 %v382, %v1058
        %v1060 = vand.u32 %v1059, 4294901760
        %1061 = vmatpush.msra.mxu0 %v1060
        %v1062 = vand.u32 %v381, 4294901760
        %v1063 = vsub.f32 %v381, %v1062
        %v1064 = vand.u32 %v1063, 4294901760
        %1065 = vmatpush.msra.mxu0 %v1064
        %v1066 = vand.u32 %v380, 4294901760
        %v1067 = vsub.f32 %v380, %v1066
        %v1068 = vand.u32 %v1067, 4294901760
        %1069 = vmatpush.msra.mxu0 %v1068
        %v1070 = vand.u32 %v379, 4294901760
        %v1071 = vsub.f32 %v379, %v1070
        %v1072 = vand.u32 %v1071, 4294901760
        %1073 = vmatpush.msra.mxu0 %v1072
        %v1074 = vand.u32 %v378, 4294901760
        %v1075 = vsub.f32 %v378, %v1074
        %v1076 = vand.u32 %v1075, 4294901760
        %1077 = vmatpush.msra.mxu0 %v1076
        %v1078 = vand.u32 %v483, 4294901760
        %1079 = vmatmul.f32.gmra.mxu0 %v1078
        %v1080 = vpop.f32.mrf.mxu0
        %v1081 = vadd.f32 %v946, %v1080
        %v1082 = vand.u32 %v486, 4294901760
        %1083 = vmatmul.f32.gmra.mxu0 %v1082
        %v1084 = vpop.f32.mrf.mxu0
        %v1085 = vadd.f32 %v952, %v1084
        %v1086 = vand.u32 %v489, 4294901760
        %1087 = vmatmul.f32.gmra.mxu0 %v1086
        %v1088 = vpop.f32.mrf.mxu0
        %v1089 = vadd.f32 %v958, %v1088
        %v1090 = vand.u32 %v492, 4294901760
        %1091 = vmatmul.f32.gmra.mxu0 %v1090
        %v1092 = vpop.f32.mrf.mxu0
        %v1093 = vadd.f32 %v964, %v1092
        %v1094 = vand.u32 %v495, 4294901760
        %1095 = vmatmul.f32.gmra.mxu0 %v1094
        %v1096 = vpop.f32.mrf.mxu0
        %v1097 = vadd.f32 %v970, %v1096
        %v1098 = vand.u32 %v498, 4294901760
        %1099 = vmatmul.f32.gmra.mxu0 %v1098
        %v1100 = vpop.f32.mrf.mxu0
        %v1101 = vadd.f32 %v976, %v1100
        %v1102 = vand.u32 %v501, 4294901760
        %1103 = vmatmul.f32.gmra.mxu0 %v1102
        %v1104 = vpop.f32.mrf.mxu0
        %v1105 = vadd.f32 %v982, %v1104
        %v1106 = vand.u32 %v504, 4294901760
        %1107 = vmatmul.f32.gmra.mxu0 %v1106
        %v1108 = vpop.f32.mrf.mxu0
        %v1109 = vadd.f32 %v988, %v1108
        %v1110 = vand.u32 %v507, 4294901760
        %1111 = vmatmul.f32.gmra.mxu0 %v1110
        %v1112 = vpop.f32.mrf.mxu0
        %v1113 = vadd.f32 %v994, %v1112
        %v1114 = vand.u32 %v510, 4294901760
        %1115 = vmatmul.f32.gmra.mxu0 %v1114
        %v1116 = vpop.f32.mrf.mxu0
        %v1117 = vadd.f32 %v1000, %v1116
        %v1118 = vand.u32 %v513, 4294901760
        %1119 = vmatmul.f32.gmra.mxu0 %v1118
        %v1120 = vpop.f32.mrf.mxu0
        %v1121 = vadd.f32 %v1006, %v1120
        %v1122 = vand.u32 %v516, 4294901760
        %1123 = vmatmul.f32.gmra.mxu0 %v1122
        %v1124 = vpop.f32.mrf.mxu0
        %v1125 = vadd.f32 %v1012, %v1124
        %v1126 = vand.u32 %v519, 4294901760
        %1127 = vmatmul.f32.gmra.mxu0 %v1126
        %v1128 = vpop.f32.mrf.mxu0
        %v1129 = vadd.f32 %v1018, %v1128
        %v1130 = vand.u32 %v522, 4294901760
        %1131 = vmatmul.f32.gmra.mxu0 %v1130
        %v1132 = vpop.f32.mrf.mxu0
        %v1133 = vadd.f32 %v1024, %v1132
        %v1134 = vand.u32 %v525, 4294901760
        %1135 = vmatmul.f32.gmra.mxu0 %v1134
        %v1136 = vpop.f32.mrf.mxu0
        %v1137 = vadd.f32 %v1030, %v1136
        %v1138 = vand.u32 %v528, 4294901760
        %1139 = vmatmul.f32.gmra.mxu0 %v1138
        %v1140 = vpop.f32.mrf.mxu0
        %v1141 = vadd.f32 %v1036, %v1140
        %1142 = vdwg.mxu0
        %1143 = vmatpush.msra.mxu0 0.0
        %1144 = vmatpush.msra.mxu0 0.0
        %1145 = vmatpush.msra.mxu0 0.0
        %1146 = vmatpush.msra.mxu0 0.0
        %1147 = vmatpush.msra.mxu0 0.0
        %1148 = vmatpush.msra.mxu0 0.0
        %1149 = vmatpush.msra.mxu0 0.0
        %1150 = vmatpush.msra.mxu0 0.0
        %v1151 = vand.u32 %v385, 4294901760
        %1152 = vmatpush.msra.mxu0 %v1151
        %v1153 = vand.u32 %v384, 4294901760
        %1154 = vmatpush.msra.mxu0 %v1153
        %v1155 = vand.u32 %v383, 4294901760
        %1156 = vmatpush.msra.mxu0 %v1155
        %v1157 = vand.u32 %v382, 4294901760
        %1158 = vmatpush.msra.mxu0 %v1157
        %v1159 = vand.u32 %v381, 4294901760
        %1160 = vmatpush.msra.mxu0 %v1159
        %v1161 = vand.u32 %v380, 4294901760
        %1162 = vmatpush.msra.mxu0 %v1161
        %v1163 = vand.u32 %v379, 4294901760
        %1164 = vmatpush.msra.mxu0 %v1163
        %v1165 = vand.u32 %v378, 4294901760
        %1166 = vmatpush.msra.mxu0 %v1165
        %v1167 = vand.u32 %v483, 4294901760
        %1168 = vmatmul.f32.gmra.mxu0 %v1167
        %v1169 = vpop.f32.mrf.mxu0
        %v1170 = vadd.f32 %v1081, %v1169
        %v1171 = vand.u32 %v486, 4294901760
        %1172 = vmatmul.f32.gmra.mxu0 %v1171
        %v1173 = vpop.f32.mrf.mxu0
        %v1174 = vadd.f32 %v1085, %v1173
        %v1175 = vand.u32 %v489, 4294901760
        %1176 = vmatmul.f32.gmra.mxu0 %v1175
        %v1177 = vpop.f32.mrf.mxu0
        %v1178 = vadd.f32 %v1089, %v1177
        %v1179 = vand.u32 %v492, 4294901760
        %1180 = vmatmul.f32.gmra.mxu0 %v1179
        %v1181 = vpop.f32.mrf.mxu0
        %v1182 = vadd.f32 %v1093, %v1181
        %v1183 = vand.u32 %v495, 4294901760
        %1184 = vmatmul.f32.gmra.mxu0 %v1183
        %v1185 = vpop.f32.mrf.mxu0
        %v1186 = vadd.f32 %v1097, %v1185
        %v1187 = vand.u32 %v498, 4294901760
        %1188 = vmatmul.f32.gmra.mxu0 %v1187
        %v1189 = vpop.f32.mrf.mxu0
        %v1190 = vadd.f32 %v1101, %v1189
        %v1191 = vand.u32 %v501, 4294901760
        %1192 = vmatmul.f32.gmra.mxu0 %v1191
        %v1193 = vpop.f32.mrf.mxu0
        %v1194 = vadd.f32 %v1105, %v1193
        %v1195 = vand.u32 %v504, 4294901760
        %1196 = vmatmul.f32.gmra.mxu0 %v1195
        %v1197 = vpop.f32.mrf.mxu0
        %v1198 = vadd.f32 %v1109, %v1197
        %v1199 = vand.u32 %v507, 4294901760
        %1200 = vmatmul.f32.gmra.mxu0 %v1199
        %v1201 = vpop.f32.mrf.mxu0
        %v1202 = vadd.f32 %v1113, %v1201
        %v1203 = vand.u32 %v510, 4294901760
        %1204 = vmatmul.f32.gmra.mxu0 %v1203
        %v1205 = vpop.f32.mrf.mxu0
        %v1206 = vadd.f32 %v1117, %v1205
        %v1207 = vand.u32 %v513, 4294901760
        %1208 = vmatmul.f32.gmra.mxu0 %v1207
        %v1209 = vpop.f32.mrf.mxu0
        %v1210 = vadd.f32 %v1121, %v1209
        %v1211 = vand.u32 %v516, 4294901760
        %1212 = vmatmul.f32.gmra.mxu0 %v1211
        %v1213 = vpop.f32.mrf.mxu0
        %v1214 = vadd.f32 %v1125, %v1213
        %v1215 = vand.u32 %v519, 4294901760
        %1216 = vmatmul.f32.gmra.mxu0 %v1215
        %v1217 = vpop.f32.mrf.mxu0
        %v1218 = vadd.f32 %v1129, %v1217
        %v1219 = vand.u32 %v522, 4294901760
        %1220 = vmatmul.f32.gmra.mxu0 %v1219
        %v1221 = vpop.f32.mrf.mxu0
        %v1222 = vadd.f32 %v1133, %v1221
        %v1223 = vand.u32 %v525, 4294901760
        %1224 = vmatmul.f32.gmra.mxu0 %v1223
        %v1225 = vpop.f32.mrf.mxu0
        %v1226 = vadd.f32 %v1137, %v1225
        %v1227 = vand.u32 %v528, 4294901760
        %1228 = vmatmul.f32.gmra.mxu0 %v1227
        %v1229 = vpop.f32.mrf.mxu0
        %v1230 = vadd.f32 %v1141, %v1229
        %1231 = vdwg.mxu0
        %1232 = vxpose.xlu0.b32.start [1/16] %v386, 128
        %1233 = vxpose.xlu0.b32.cont [2/16] %v387, 128
        %1234 = vxpose.xlu0.b32.cont [3/16] %v388, 128
        %1235 = vxpose.xlu0.b32.cont [4/16] %v389, 128
        %1236 = vxpose.xlu0.b32.cont [5/16] %v390, 128
        %1237 = vxpose.xlu0.b32.cont [6/16] %v391, 128
        %1238 = vxpose.xlu0.b32.cont [7/16] %v392, 128
        %1239 = vxpose.xlu0.b32.cont [8/16] %v393, 128
        %1240 = vxpose.xlu0.b32.cont [9/16] 0.0, 128
        %1241 = vxpose.xlu0.b32.cont [10/16] 0.0, 128
        %1242 = vxpose.xlu0.b32.cont [11/16] 0.0, 128
        %1243 = vxpose.xlu0.b32.cont [12/16] 0.0, 128
        %1244 = vxpose.xlu0.b32.cont [13/16] 0.0, 128
        %1245 = vxpose.xlu0.b32.cont [14/16] 0.0, 128
        %1246 = vxpose.xlu0.b32.cont [15/16] 0.0, 128
        %1247 = vxpose.xlu0.b32.end [16/16] 0.0, 128
        %v1248 = vpop.trf.xlu0
        %v1249 = vpop.trf.xlu0
        %v1250 = vpop.trf.xlu0
        %v1251 = vpop.trf.xlu0
        %v1252 = vpop.trf.xlu0
        %v1253 = vpop.trf.xlu0
        %v1254 = vpop.trf.xlu0
        %v1255 = vpop.trf.xlu0
        %v1256 = vpop.trf.xlu0
        %v1257 = vpop.trf.xlu0
        %v1258 = vpop.trf.xlu0
        %v1259 = vpop.trf.xlu0
        %v1260 = vpop.trf.xlu0
        %v1261 = vpop.trf.xlu0
        %v1262 = vpop.trf.xlu0
        %v1263 = vpop.trf.xlu0
        %v1265 = vsel %vm481, %v1248, 0
        %v1268 = vsel %vm481, %v1249, 0
        %v1271 = vsel %vm481, %v1250, 0
        %v1274 = vsel %vm481, %v1251, 0
        %v1277 = vsel %vm481, %v1252, 0
        %v1280 = vsel %vm481, %v1253, 0
        %v1283 = vsel %vm481, %v1254, 0
        %v1286 = vsel %vm481, %v1255, 0
        %v1289 = vsel %vm481, %v1256, 0
        %v1292 = vsel %vm481, %v1257, 0
        %v1295 = vsel %vm481, %v1258, 0
        %v1298 = vsel %vm481, %v1259, 0
        %v1301 = vsel %vm481, %v1260, 0
        %v1304 = vsel %vm481, %v1261, 0
        %v1307 = vsel %vm481, %v1262, 0
        %v1310 = vsel %vm481, %v1263, 0
        %1312 = vmatpush.msra.mxu0 0.0
        %1313 = vmatpush.msra.mxu0 0.0
        %1314 = vmatpush.msra.mxu0 0.0
        %1315 = vmatpush.msra.mxu0 0.0
        %1316 = vmatpush.msra.mxu0 0.0
        %1317 = vmatpush.msra.mxu0 0.0
        %1318 = vmatpush.msra.mxu0 0.0
        %1319 = vmatpush.msra.mxu0 0.0
        %v1320 = vand.u32 %v393, 4294901760
        %1321 = vmatpush.msra.mxu0 %v1320
        %v1322 = vand.u32 %v392, 4294901760
        %1323 = vmatpush.msra.mxu0 %v1322
        %v1324 = vand.u32 %v391, 4294901760
        %1325 = vmatpush.msra.mxu0 %v1324
        %v1326 = vand.u32 %v390, 4294901760
        %1327 = vmatpush.msra.mxu0 %v1326
        %v1328 = vand.u32 %v389, 4294901760
        %1329 = vmatpush.msra.mxu0 %v1328
        %v1330 = vand.u32 %v388, 4294901760
        %1331 = vmatpush.msra.mxu0 %v1330
        %v1332 = vand.u32 %v387, 4294901760
        %1333 = vmatpush.msra.mxu0 %v1332
        %v1334 = vand.u32 %v386, 4294901760
        %1335 = vmatpush.msra.mxu0 %v1334
        %v1336 = vand.u32 %v1265, 4294901760
        %v1337 = vsub.f32 %v1265, %v1336
        %v1338 = vand.u32 %v1337, 4294901760
        %v1339 = vsub.f32 %v1337, %v1338
        %v1340 = vand.u32 %v1339, 4294901760
        %1341 = vmatmul.f32.gmra.mxu0 %v1340
        %v1342 = vpop.f32.mrf.mxu0
        %v1343 = vadd.f32 0.0, %v1342
        %v1344 = vand.u32 %v1268, 4294901760
        %v1345 = vsub.f32 %v1268, %v1344
        %v1346 = vand.u32 %v1345, 4294901760
        %v1347 = vsub.f32 %v1345, %v1346
        %v1348 = vand.u32 %v1347, 4294901760
        %1349 = vmatmul.f32.gmra.mxu0 %v1348
        %v1350 = vpop.f32.mrf.mxu0
        %v1351 = vadd.f32 0.0, %v1350
        %v1352 = vand.u32 %v1271, 4294901760
        %v1353 = vsub.f32 %v1271, %v1352
        %v1354 = vand.u32 %v1353, 4294901760
        %v1355 = vsub.f32 %v1353, %v1354
        %v1356 = vand.u32 %v1355, 4294901760
        %1357 = vmatmul.f32.gmra.mxu0 %v1356
        %v1358 = vpop.f32.mrf.mxu0
        %v1359 = vadd.f32 0.0, %v1358
        %v1360 = vand.u32 %v1274, 4294901760
        %v1361 = vsub.f32 %v1274, %v1360
        %v1362 = vand.u32 %v1361, 4294901760
        %v1363 = vsub.f32 %v1361, %v1362
        %v1364 = vand.u32 %v1363, 4294901760
        %1365 = vmatmul.f32.gmra.mxu0 %v1364
        %v1366 = vpop.f32.mrf.mxu0
        %v1367 = vadd.f32 0.0, %v1366
        %v1368 = vand.u32 %v1277, 4294901760
        %v1369 = vsub.f32 %v1277, %v1368
        %v1370 = vand.u32 %v1369, 4294901760
        %v1371 = vsub.f32 %v1369, %v1370
        %v1372 = vand.u32 %v1371, 4294901760
        %1373 = vmatmul.f32.gmra.mxu0 %v1372
        %v1374 = vpop.f32.mrf.mxu0
        %v1375 = vadd.f32 0.0, %v1374
        %v1376 = vand.u32 %v1280, 4294901760
        %v1377 = vsub.f32 %v1280, %v1376
        %v1378 = vand.u32 %v1377, 4294901760
        %v1379 = vsub.f32 %v1377, %v1378
        %v1380 = vand.u32 %v1379, 4294901760
        %1381 = vmatmul.f32.gmra.mxu0 %v1380
        %v1382 = vpop.f32.mrf.mxu0
        %v1383 = vadd.f32 0.0, %v1382
        %v1384 = vand.u32 %v1283, 4294901760
        %v1385 = vsub.f32 %v1283, %v1384
        %v1386 = vand.u32 %v1385, 4294901760
        %v1387 = vsub.f32 %v1385, %v1386
        %v1388 = vand.u32 %v1387, 4294901760
        %1389 = vmatmul.f32.gmra.mxu0 %v1388
        %v1390 = vpop.f32.mrf.mxu0
        %v1391 = vadd.f32 0.0, %v1390
        %v1392 = vand.u32 %v1286, 4294901760
        %v1393 = vsub.f32 %v1286, %v1392
        %v1394 = vand.u32 %v1393, 4294901760
        %v1395 = vsub.f32 %v1393, %v1394
        %v1396 = vand.u32 %v1395, 4294901760
        %1397 = vmatmul.f32.gmra.mxu0 %v1396
        %v1398 = vpop.f32.mrf.mxu0
        %v1399 = vadd.f32 0.0, %v1398
        %v1400 = vand.u32 %v1289, 4294901760
        %v1401 = vsub.f32 %v1289, %v1400
        %v1402 = vand.u32 %v1401, 4294901760
        %v1403 = vsub.f32 %v1401, %v1402
        %v1404 = vand.u32 %v1403, 4294901760
        %1405 = vmatmul.f32.gmra.mxu0 %v1404
        %v1406 = vpop.f32.mrf.mxu0
        %v1407 = vadd.f32 0.0, %v1406
        %v1408 = vand.u32 %v1292, 4294901760
        %v1409 = vsub.f32 %v1292, %v1408
        %v1410 = vand.u32 %v1409, 4294901760
        %v1411 = vsub.f32 %v1409, %v1410
        %v1412 = vand.u32 %v1411, 4294901760
        %1413 = vmatmul.f32.gmra.mxu0 %v1412
        %v1414 = vpop.f32.mrf.mxu0
        %v1415 = vadd.f32 0.0, %v1414
        %v1416 = vand.u32 %v1295, 4294901760
        %v1417 = vsub.f32 %v1295, %v1416
        %v1418 = vand.u32 %v1417, 4294901760
        %v1419 = vsub.f32 %v1417, %v1418
        %v1420 = vand.u32 %v1419, 4294901760
        %1421 = vmatmul.f32.gmra.mxu0 %v1420
        %v1422 = vpop.f32.mrf.mxu0
        %v1423 = vadd.f32 0.0, %v1422
        %v1424 = vand.u32 %v1298, 4294901760
        %v1425 = vsub.f32 %v1298, %v1424
        %v1426 = vand.u32 %v1425, 4294901760
        %v1427 = vsub.f32 %v1425, %v1426
        %v1428 = vand.u32 %v1427, 4294901760
        %1429 = vmatmul.f32.gmra.mxu0 %v1428
        %v1430 = vpop.f32.mrf.mxu0
        %v1431 = vadd.f32 0.0, %v1430
        %v1432 = vand.u32 %v1301, 4294901760
        %v1433 = vsub.f32 %v1301, %v1432
        %v1434 = vand.u32 %v1433, 4294901760
        %v1435 = vsub.f32 %v1433, %v1434
        %v1436 = vand.u32 %v1435, 4294901760
        %1437 = vmatmul.f32.gmra.mxu0 %v1436
        %v1438 = vpop.f32.mrf.mxu0
        %v1439 = vadd.f32 0.0, %v1438
        %v1440 = vand.u32 %v1304, 4294901760
        %v1441 = vsub.f32 %v1304, %v1440
        %v1442 = vand.u32 %v1441, 4294901760
        %v1443 = vsub.f32 %v1441, %v1442
        %v1444 = vand.u32 %v1443, 4294901760
        %1445 = vmatmul.f32.gmra.mxu0 %v1444
        %v1446 = vpop.f32.mrf.mxu0
        %v1447 = vadd.f32 0.0, %v1446
        %v1448 = vand.u32 %v1307, 4294901760
        %v1449 = vsub.f32 %v1307, %v1448
        %v1450 = vand.u32 %v1449, 4294901760
        %v1451 = vsub.f32 %v1449, %v1450
        %v1452 = vand.u32 %v1451, 4294901760
        %1453 = vmatmul.f32.gmra.mxu0 %v1452
        %v1454 = vpop.f32.mrf.mxu0
        %v1455 = vadd.f32 0.0, %v1454
        %v1456 = vand.u32 %v1310, 4294901760
        %v1457 = vsub.f32 %v1310, %v1456
        %v1458 = vand.u32 %v1457, 4294901760
        %v1459 = vsub.f32 %v1457, %v1458
        %v1460 = vand.u32 %v1459, 4294901760
        %1461 = vmatmul.f32.gmra.mxu0 %v1460
        %v1462 = vpop.f32.mrf.mxu0
        %v1463 = vadd.f32 0.0, %v1462
        %1464 = vdwg.mxu0
        %1465 = vmatpush.msra.mxu0 0.0
        %1466 = vmatpush.msra.mxu0 0.0
        %1467 = vmatpush.msra.mxu0 0.0
        %1468 = vmatpush.msra.mxu0 0.0
        %1469 = vmatpush.msra.mxu0 0.0
        %1470 = vmatpush.msra.mxu0 0.0
        %1471 = vmatpush.msra.mxu0 0.0
        %1472 = vmatpush.msra.mxu0 0.0
        %v1473 = vand.u32 %v393, 4294901760
        %v1474 = vsub.f32 %v393, %v1473
        %v1475 = vand.u32 %v1474, 4294901760
        %v1476 = vsub.f32 %v1474, %v1475
        %v1477 = vand.u32 %v1476, 4294901760
        %1478 = vmatpush.msra.mxu0 %v1477
        %v1479 = vand.u32 %v392, 4294901760
        %v1480 = vsub.f32 %v392, %v1479
        %v1481 = vand.u32 %v1480, 4294901760
        %v1482 = vsub.f32 %v1480, %v1481
        %v1483 = vand.u32 %v1482, 4294901760
        %1484 = vmatpush.msra.mxu0 %v1483
        %v1485 = vand.u32 %v391, 4294901760
        %v1486 = vsub.f32 %v391, %v1485
        %v1487 = vand.u32 %v1486, 4294901760
        %v1488 = vsub.f32 %v1486, %v1487
        %v1489 = vand.u32 %v1488, 4294901760
        %1490 = vmatpush.msra.mxu0 %v1489
        %v1491 = vand.u32 %v390, 4294901760
        %v1492 = vsub.f32 %v390, %v1491
        %v1493 = vand.u32 %v1492, 4294901760
        %v1494 = vsub.f32 %v1492, %v1493
        %v1495 = vand.u32 %v1494, 4294901760
        %1496 = vmatpush.msra.mxu0 %v1495
        %v1497 = vand.u32 %v389, 4294901760
        %v1498 = vsub.f32 %v389, %v1497
        %v1499 = vand.u32 %v1498, 4294901760
        %v1500 = vsub.f32 %v1498, %v1499
        %v1501 = vand.u32 %v1500, 4294901760
        %1502 = vmatpush.msra.mxu0 %v1501
        %v1503 = vand.u32 %v388, 4294901760
        %v1504 = vsub.f32 %v388, %v1503
        %v1505 = vand.u32 %v1504, 4294901760
        %v1506 = vsub.f32 %v1504, %v1505
        %v1507 = vand.u32 %v1506, 4294901760
        %1508 = vmatpush.msra.mxu0 %v1507
        %v1509 = vand.u32 %v387, 4294901760
        %v1510 = vsub.f32 %v387, %v1509
        %v1511 = vand.u32 %v1510, 4294901760
        %v1512 = vsub.f32 %v1510, %v1511
        %v1513 = vand.u32 %v1512, 4294901760
        %1514 = vmatpush.msra.mxu0 %v1513
        %v1515 = vand.u32 %v386, 4294901760
        %v1516 = vsub.f32 %v386, %v1515
        %v1517 = vand.u32 %v1516, 4294901760
        %v1518 = vsub.f32 %v1516, %v1517
        %v1519 = vand.u32 %v1518, 4294901760
        %1520 = vmatpush.msra.mxu0 %v1519
        %v1521 = vand.u32 %v1265, 4294901760
        %1522 = vmatmul.f32.gmra.mxu0 %v1521
        %v1523 = vpop.f32.mrf.mxu0
        %v1524 = vadd.f32 %v1343, %v1523
        %v1525 = vand.u32 %v1268, 4294901760
        %1526 = vmatmul.f32.gmra.mxu0 %v1525
        %v1527 = vpop.f32.mrf.mxu0
        %v1528 = vadd.f32 %v1351, %v1527
        %v1529 = vand.u32 %v1271, 4294901760
        %1530 = vmatmul.f32.gmra.mxu0 %v1529
        %v1531 = vpop.f32.mrf.mxu0
        %v1532 = vadd.f32 %v1359, %v1531
        %v1533 = vand.u32 %v1274, 4294901760
        %1534 = vmatmul.f32.gmra.mxu0 %v1533
        %v1535 = vpop.f32.mrf.mxu0
        %v1536 = vadd.f32 %v1367, %v1535
        %v1537 = vand.u32 %v1277, 4294901760
        %1538 = vmatmul.f32.gmra.mxu0 %v1537
        %v1539 = vpop.f32.mrf.mxu0
        %v1540 = vadd.f32 %v1375, %v1539
        %v1541 = vand.u32 %v1280, 4294901760
        %1542 = vmatmul.f32.gmra.mxu0 %v1541
        %v1543 = vpop.f32.mrf.mxu0
        %v1544 = vadd.f32 %v1383, %v1543
        %v1545 = vand.u32 %v1283, 4294901760
        %1546 = vmatmul.f32.gmra.mxu0 %v1545
        %v1547 = vpop.f32.mrf.mxu0
        %v1548 = vadd.f32 %v1391, %v1547
        %v1549 = vand.u32 %v1286, 4294901760
        %1550 = vmatmul.f32.gmra.mxu0 %v1549
        %v1551 = vpop.f32.mrf.mxu0
        %v1552 = vadd.f32 %v1399, %v1551
        %v1553 = vand.u32 %v1289, 4294901760
        %1554 = vmatmul.f32.gmra.mxu0 %v1553
        %v1555 = vpop.f32.mrf.mxu0
        %v1556 = vadd.f32 %v1407, %v1555
        %v1557 = vand.u32 %v1292, 4294901760
        %1558 = vmatmul.f32.gmra.mxu0 %v1557
        %v1559 = vpop.f32.mrf.mxu0
        %v1560 = vadd.f32 %v1415, %v1559
        %v1561 = vand.u32 %v1295, 4294901760
        %1562 = vmatmul.f32.gmra.mxu0 %v1561
        %v1563 = vpop.f32.mrf.mxu0
        %v1564 = vadd.f32 %v1423, %v1563
        %v1565 = vand.u32 %v1298, 4294901760
        %1566 = vmatmul.f32.gmra.mxu0 %v1565
        %v1567 = vpop.f32.mrf.mxu0
        %v1568 = vadd.f32 %v1431, %v1567
        %v1569 = vand.u32 %v1301, 4294901760
        %1570 = vmatmul.f32.gmra.mxu0 %v1569
        %v1571 = vpop.f32.mrf.mxu0
        %v1572 = vadd.f32 %v1439, %v1571
        %v1573 = vand.u32 %v1304, 4294901760
        %1574 = vmatmul.f32.gmra.mxu0 %v1573
        %v1575 = vpop.f32.mrf.mxu0
        %v1576 = vadd.f32 %v1447, %v1575
        %v1577 = vand.u32 %v1307, 4294901760
        %1578 = vmatmul.f32.gmra.mxu0 %v1577
        %v1579 = vpop.f32.mrf.mxu0
        %v1580 = vadd.f32 %v1455, %v1579
        %v1581 = vand.u32 %v1310, 4294901760
        %1582 = vmatmul.f32.gmra.mxu0 %v1581
        %v1583 = vpop.f32.mrf.mxu0
        %v1584 = vadd.f32 %v1463, %v1583
        %1585 = vdwg.mxu0
        %1586 = vmatpush.msra.mxu0 0.0
        %1587 = vmatpush.msra.mxu0 0.0
        %1588 = vmatpush.msra.mxu0 0.0
        %1589 = vmatpush.msra.mxu0 0.0
        %1590 = vmatpush.msra.mxu0 0.0
        %1591 = vmatpush.msra.mxu0 0.0
        %1592 = vmatpush.msra.mxu0 0.0
        %1593 = vmatpush.msra.mxu0 0.0
        %v1594 = vand.u32 %v393, 4294901760
        %v1595 = vsub.f32 %v393, %v1594
        %1596 = vmatpush.msra.mxu0 %v1595
        %v1597 = vand.u32 %v392, 4294901760
        %v1598 = vsub.f32 %v392, %v1597
        %1599 = vmatpush.msra.mxu0 %v1598
        %v1600 = vand.u32 %v391, 4294901760
        %v1601 = vsub.f32 %v391, %v1600
        %1602 = vmatpush.msra.mxu0 %v1601
        %v1603 = vand.u32 %v390, 4294901760
        %v1604 = vsub.f32 %v390, %v1603
        %1605 = vmatpush.msra.mxu0 %v1604
        %v1606 = vand.u32 %v389, 4294901760
        %v1607 = vsub.f32 %v389, %v1606
        %1608 = vmatpush.msra.mxu0 %v1607
        %v1609 = vand.u32 %v388, 4294901760
        %v1610 = vsub.f32 %v388, %v1609
        %1611 = vmatpush.msra.mxu0 %v1610
        %v1612 = vand.u32 %v387, 4294901760
        %v1613 = vsub.f32 %v387, %v1612
        %1614 = vmatpush.msra.mxu0 %v1613
        %v1615 = vand.u32 %v386, 4294901760
        %v1616 = vsub.f32 %v386, %v1615
        %1617 = vmatpush.msra.mxu0 %v1616
        %v1618 = vand.u32 %v1265, 4294901760
        %v1619 = vsub.f32 %v1265, %v1618
        %1620 = vmatmul.f32.gmra.mxu0 %v1619
        %v1621 = vpop.f32.mrf.mxu0
        %v1622 = vadd.f32 %v1524, %v1621
        %v1623 = vand.u32 %v1268, 4294901760
        %v1624 = vsub.f32 %v1268, %v1623
        %1625 = vmatmul.f32.gmra.mxu0 %v1624
        %v1626 = vpop.f32.mrf.mxu0
        %v1627 = vadd.f32 %v1528, %v1626
        %v1628 = vand.u32 %v1271, 4294901760
        %v1629 = vsub.f32 %v1271, %v1628
        %1630 = vmatmul.f32.gmra.mxu0 %v1629
        %v1631 = vpop.f32.mrf.mxu0
        %v1632 = vadd.f32 %v1532, %v1631
        %v1633 = vand.u32 %v1274, 4294901760
        %v1634 = vsub.f32 %v1274, %v1633
        %1635 = vmatmul.f32.gmra.mxu0 %v1634
        %v1636 = vpop.f32.mrf.mxu0
        %v1637 = vadd.f32 %v1536, %v1636
        %v1638 = vand.u32 %v1277, 4294901760
        %v1639 = vsub.f32 %v1277, %v1638
        %1640 = vmatmul.f32.gmra.mxu0 %v1639
        %v1641 = vpop.f32.mrf.mxu0
        %v1642 = vadd.f32 %v1540, %v1641
        %v1643 = vand.u32 %v1280, 4294901760
        %v1644 = vsub.f32 %v1280, %v1643
        %1645 = vmatmul.f32.gmra.mxu0 %v1644
        %v1646 = vpop.f32.mrf.mxu0
        %v1647 = vadd.f32 %v1544, %v1646
        %v1648 = vand.u32 %v1283, 4294901760
        %v1649 = vsub.f32 %v1283, %v1648
        %1650 = vmatmul.f32.gmra.mxu0 %v1649
        %v1651 = vpop.f32.mrf.mxu0
        %v1652 = vadd.f32 %v1548, %v1651
        %v1653 = vand.u32 %v1286, 4294901760
        %v1654 = vsub.f32 %v1286, %v1653
        %1655 = vmatmul.f32.gmra.mxu0 %v1654
        %v1656 = vpop.f32.mrf.mxu0
        %v1657 = vadd.f32 %v1552, %v1656
        %v1658 = vand.u32 %v1289, 4294901760
        %v1659 = vsub.f32 %v1289, %v1658
        %1660 = vmatmul.f32.gmra.mxu0 %v1659
        %v1661 = vpop.f32.mrf.mxu0
        %v1662 = vadd.f32 %v1556, %v1661
        %v1663 = vand.u32 %v1292, 4294901760
        %v1664 = vsub.f32 %v1292, %v1663
        %1665 = vmatmul.f32.gmra.mxu0 %v1664
        %v1666 = vpop.f32.mrf.mxu0
        %v1667 = vadd.f32 %v1560, %v1666
        %v1668 = vand.u32 %v1295, 4294901760
        %v1669 = vsub.f32 %v1295, %v1668
        %1670 = vmatmul.f32.gmra.mxu0 %v1669
        %v1671 = vpop.f32.mrf.mxu0
        %v1672 = vadd.f32 %v1564, %v1671
        %v1673 = vand.u32 %v1298, 4294901760
        %v1674 = vsub.f32 %v1298, %v1673
        %1675 = vmatmul.f32.gmra.mxu0 %v1674
        %v1676 = vpop.f32.mrf.mxu0
        %v1677 = vadd.f32 %v1568, %v1676
        %v1678 = vand.u32 %v1301, 4294901760
        %v1679 = vsub.f32 %v1301, %v1678
        %1680 = vmatmul.f32.gmra.mxu0 %v1679
        %v1681 = vpop.f32.mrf.mxu0
        %v1682 = vadd.f32 %v1572, %v1681
        %v1683 = vand.u32 %v1304, 4294901760
        %v1684 = vsub.f32 %v1304, %v1683
        %1685 = vmatmul.f32.gmra.mxu0 %v1684
        %v1686 = vpop.f32.mrf.mxu0
        %v1687 = vadd.f32 %v1576, %v1686
        %v1688 = vand.u32 %v1307, 4294901760
        %v1689 = vsub.f32 %v1307, %v1688
        %1690 = vmatmul.f32.gmra.mxu0 %v1689
        %v1691 = vpop.f32.mrf.mxu0
        %v1692 = vadd.f32 %v1580, %v1691
        %v1693 = vand.u32 %v1310, 4294901760
        %v1694 = vsub.f32 %v1310, %v1693
        %1695 = vmatmul.f32.gmra.mxu0 %v1694
        %v1696 = vpop.f32.mrf.mxu0
        %v1697 = vadd.f32 %v1584, %v1696
        %1698 = vdwg.mxu0
        %1699 = vmatpush.msra.mxu0 0.0
        %1700 = vmatpush.msra.mxu0 0.0
        %1701 = vmatpush.msra.mxu0 0.0
        %1702 = vmatpush.msra.mxu0 0.0
        %1703 = vmatpush.msra.mxu0 0.0
        %1704 = vmatpush.msra.mxu0 0.0
        %1705 = vmatpush.msra.mxu0 0.0
        %1706 = vmatpush.msra.mxu0 0.0
        %v1707 = vand.u32 %v393, 4294901760
        %1708 = vmatpush.msra.mxu0 %v1707
        %v1709 = vand.u32 %v392, 4294901760
        %1710 = vmatpush.msra.mxu0 %v1709
        %v1711 = vand.u32 %v391, 4294901760
        %1712 = vmatpush.msra.mxu0 %v1711
        %v1713 = vand.u32 %v390, 4294901760
        %1714 = vmatpush.msra.mxu0 %v1713
        %v1715 = vand.u32 %v389, 4294901760
        %1716 = vmatpush.msra.mxu0 %v1715
        %v1717 = vand.u32 %v388, 4294901760
        %1718 = vmatpush.msra.mxu0 %v1717
        %v1719 = vand.u32 %v387, 4294901760
        %1720 = vmatpush.msra.mxu0 %v1719
        %v1721 = vand.u32 %v386, 4294901760
        %1722 = vmatpush.msra.mxu0 %v1721
        %v1723 = vand.u32 %v1265, 4294901760
        %v1724 = vsub.f32 %v1265, %v1723
        %v1725 = vand.u32 %v1724, 4294901760
        %1726 = vmatmul.f32.gmra.mxu0 %v1725
        %v1727 = vpop.f32.mrf.mxu0
        %v1728 = vadd.f32 %v1622, %v1727
        %v1729 = vand.u32 %v1268, 4294901760
        %v1730 = vsub.f32 %v1268, %v1729
        %v1731 = vand.u32 %v1730, 4294901760
        %1732 = vmatmul.f32.gmra.mxu0 %v1731
        %v1733 = vpop.f32.mrf.mxu0
        %v1734 = vadd.f32 %v1627, %v1733
        %v1735 = vand.u32 %v1271, 4294901760
        %v1736 = vsub.f32 %v1271, %v1735
        %v1737 = vand.u32 %v1736, 4294901760
        %1738 = vmatmul.f32.gmra.mxu0 %v1737
        %v1739 = vpop.f32.mrf.mxu0
        %v1740 = vadd.f32 %v1632, %v1739
        %v1741 = vand.u32 %v1274, 4294901760
        %v1742 = vsub.f32 %v1274, %v1741
        %v1743 = vand.u32 %v1742, 4294901760
        %1744 = vmatmul.f32.gmra.mxu0 %v1743
        %v1745 = vpop.f32.mrf.mxu0
        %v1746 = vadd.f32 %v1637, %v1745
        %v1747 = vand.u32 %v1277, 4294901760
        %v1748 = vsub.f32 %v1277, %v1747
        %v1749 = vand.u32 %v1748, 4294901760
        %1750 = vmatmul.f32.gmra.mxu0 %v1749
        %v1751 = vpop.f32.mrf.mxu0
        %v1752 = vadd.f32 %v1642, %v1751
        %v1753 = vand.u32 %v1280, 4294901760
        %v1754 = vsub.f32 %v1280, %v1753
        %v1755 = vand.u32 %v1754, 4294901760
        %1756 = vmatmul.f32.gmra.mxu0 %v1755
        %v1757 = vpop.f32.mrf.mxu0
        %v1758 = vadd.f32 %v1647, %v1757
        %v1759 = vand.u32 %v1283, 4294901760
        %v1760 = vsub.f32 %v1283, %v1759
        %v1761 = vand.u32 %v1760, 4294901760
        %1762 = vmatmul.f32.gmra.mxu0 %v1761
        %v1763 = vpop.f32.mrf.mxu0
        %v1764 = vadd.f32 %v1652, %v1763
        %v1765 = vand.u32 %v1286, 4294901760
        %v1766 = vsub.f32 %v1286, %v1765
        %v1767 = vand.u32 %v1766, 4294901760
        %1768 = vmatmul.f32.gmra.mxu0 %v1767
        %v1769 = vpop.f32.mrf.mxu0
        %v1770 = vadd.f32 %v1657, %v1769
        %v1771 = vand.u32 %v1289, 4294901760
        %v1772 = vsub.f32 %v1289, %v1771
        %v1773 = vand.u32 %v1772, 4294901760
        %1774 = vmatmul.f32.gmra.mxu0 %v1773
        %v1775 = vpop.f32.mrf.mxu0
        %v1776 = vadd.f32 %v1662, %v1775
        %v1777 = vand.u32 %v1292, 4294901760
        %v1778 = vsub.f32 %v1292, %v1777
        %v1779 = vand.u32 %v1778, 4294901760
        %1780 = vmatmul.f32.gmra.mxu0 %v1779
        %v1781 = vpop.f32.mrf.mxu0
        %v1782 = vadd.f32 %v1667, %v1781
        %v1783 = vand.u32 %v1295, 4294901760
        %v1784 = vsub.f32 %v1295, %v1783
        %v1785 = vand.u32 %v1784, 4294901760
        %1786 = vmatmul.f32.gmra.mxu0 %v1785
        %v1787 = vpop.f32.mrf.mxu0
        %v1788 = vadd.f32 %v1672, %v1787
        %v1789 = vand.u32 %v1298, 4294901760
        %v1790 = vsub.f32 %v1298, %v1789
        %v1791 = vand.u32 %v1790, 4294901760
        %1792 = vmatmul.f32.gmra.mxu0 %v1791
        %v1793 = vpop.f32.mrf.mxu0
        %v1794 = vadd.f32 %v1677, %v1793
        %v1795 = vand.u32 %v1301, 4294901760
        %v1796 = vsub.f32 %v1301, %v1795
        %v1797 = vand.u32 %v1796, 4294901760
        %1798 = vmatmul.f32.gmra.mxu0 %v1797
        %v1799 = vpop.f32.mrf.mxu0
        %v1800 = vadd.f32 %v1682, %v1799
        %v1801 = vand.u32 %v1304, 4294901760
        %v1802 = vsub.f32 %v1304, %v1801
        %v1803 = vand.u32 %v1802, 4294901760
        %1804 = vmatmul.f32.gmra.mxu0 %v1803
        %v1805 = vpop.f32.mrf.mxu0
        %v1806 = vadd.f32 %v1687, %v1805
        %v1807 = vand.u32 %v1307, 4294901760
        %v1808 = vsub.f32 %v1307, %v1807
        %v1809 = vand.u32 %v1808, 4294901760
        %1810 = vmatmul.f32.gmra.mxu0 %v1809
        %v1811 = vpop.f32.mrf.mxu0
        %v1812 = vadd.f32 %v1692, %v1811
        %v1813 = vand.u32 %v1310, 4294901760
        %v1814 = vsub.f32 %v1310, %v1813
        %v1815 = vand.u32 %v1814, 4294901760
        %1816 = vmatmul.f32.gmra.mxu0 %v1815
        %v1817 = vpop.f32.mrf.mxu0
        %v1818 = vadd.f32 %v1697, %v1817
        %1819 = vdwg.mxu0
        %1820 = vmatpush.msra.mxu0 0.0
        %1821 = vmatpush.msra.mxu0 0.0
        %1822 = vmatpush.msra.mxu0 0.0
        %1823 = vmatpush.msra.mxu0 0.0
        %1824 = vmatpush.msra.mxu0 0.0
        %1825 = vmatpush.msra.mxu0 0.0
        %1826 = vmatpush.msra.mxu0 0.0
        %1827 = vmatpush.msra.mxu0 0.0
        %v1828 = vand.u32 %v393, 4294901760
        %v1829 = vsub.f32 %v393, %v1828
        %v1830 = vand.u32 %v1829, 4294901760
        %1831 = vmatpush.msra.mxu0 %v1830
        %v1832 = vand.u32 %v392, 4294901760
        %v1833 = vsub.f32 %v392, %v1832
        %v1834 = vand.u32 %v1833, 4294901760
        %1835 = vmatpush.msra.mxu0 %v1834
        %v1836 = vand.u32 %v391, 4294901760
        %v1837 = vsub.f32 %v391, %v1836
        %v1838 = vand.u32 %v1837, 4294901760
        %1839 = vmatpush.msra.mxu0 %v1838
        %v1840 = vand.u32 %v390, 4294901760
        %v1841 = vsub.f32 %v390, %v1840
        %v1842 = vand.u32 %v1841, 4294901760
        %1843 = vmatpush.msra.mxu0 %v1842
        %v1844 = vand.u32 %v389, 4294901760
        %v1845 = vsub.f32 %v389, %v1844
        %v1846 = vand.u32 %v1845, 4294901760
        %1847 = vmatpush.msra.mxu0 %v1846
        %v1848 = vand.u32 %v388, 4294901760
        %v1849 = vsub.f32 %v388, %v1848
        %v1850 = vand.u32 %v1849, 4294901760
        %1851 = vmatpush.msra.mxu0 %v1850
        %v1852 = vand.u32 %v387, 4294901760
        %v1853 = vsub.f32 %v387, %v1852
        %v1854 = vand.u32 %v1853, 4294901760
        %1855 = vmatpush.msra.mxu0 %v1854
        %v1856 = vand.u32 %v386, 4294901760
        %v1857 = vsub.f32 %v386, %v1856
        %v1858 = vand.u32 %v1857, 4294901760
        %1859 = vmatpush.msra.mxu0 %v1858
        %v1860 = vand.u32 %v1265, 4294901760
        %1861 = vmatmul.f32.gmra.mxu0 %v1860
        %v1862 = vpop.f32.mrf.mxu0
        %v1863 = vadd.f32 %v1728, %v1862
        %v1864 = vand.u32 %v1268, 4294901760
        %1865 = vmatmul.f32.gmra.mxu0 %v1864
        %v1866 = vpop.f32.mrf.mxu0
        %v1867 = vadd.f32 %v1734, %v1866
        %v1868 = vand.u32 %v1271, 4294901760
        %1869 = vmatmul.f32.gmra.mxu0 %v1868
        %v1870 = vpop.f32.mrf.mxu0
        %v1871 = vadd.f32 %v1740, %v1870
        %v1872 = vand.u32 %v1274, 4294901760
        %1873 = vmatmul.f32.gmra.mxu0 %v1872
        %v1874 = vpop.f32.mrf.mxu0
        %v1875 = vadd.f32 %v1746, %v1874
        %v1876 = vand.u32 %v1277, 4294901760
        %1877 = vmatmul.f32.gmra.mxu0 %v1876
        %v1878 = vpop.f32.mrf.mxu0
        %v1879 = vadd.f32 %v1752, %v1878
        %v1880 = vand.u32 %v1280, 4294901760
        %1881 = vmatmul.f32.gmra.mxu0 %v1880
        %v1882 = vpop.f32.mrf.mxu0
        %v1883 = vadd.f32 %v1758, %v1882
        %v1884 = vand.u32 %v1283, 4294901760
        %1885 = vmatmul.f32.gmra.mxu0 %v1884
        %v1886 = vpop.f32.mrf.mxu0
        %v1887 = vadd.f32 %v1764, %v1886
        %v1888 = vand.u32 %v1286, 4294901760
        %1889 = vmatmul.f32.gmra.mxu0 %v1888
        %v1890 = vpop.f32.mrf.mxu0
        %v1891 = vadd.f32 %v1770, %v1890
        %v1892 = vand.u32 %v1289, 4294901760
        %1893 = vmatmul.f32.gmra.mxu0 %v1892
        %v1894 = vpop.f32.mrf.mxu0
        %v1895 = vadd.f32 %v1776, %v1894
        %v1896 = vand.u32 %v1292, 4294901760
        %1897 = vmatmul.f32.gmra.mxu0 %v1896
        %v1898 = vpop.f32.mrf.mxu0
        %v1899 = vadd.f32 %v1782, %v1898
        %v1900 = vand.u32 %v1295, 4294901760
        %1901 = vmatmul.f32.gmra.mxu0 %v1900
        %v1902 = vpop.f32.mrf.mxu0
        %v1903 = vadd.f32 %v1788, %v1902
        %v1904 = vand.u32 %v1298, 4294901760
        %1905 = vmatmul.f32.gmra.mxu0 %v1904
        %v1906 = vpop.f32.mrf.mxu0
        %v1907 = vadd.f32 %v1794, %v1906
        %v1908 = vand.u32 %v1301, 4294901760
        %1909 = vmatmul.f32.gmra.mxu0 %v1908
        %v1910 = vpop.f32.mrf.mxu0
        %v1911 = vadd.f32 %v1800, %v1910
        %v1912 = vand.u32 %v1304, 4294901760
        %1913 = vmatmul.f32.gmra.mxu0 %v1912
        %v1914 = vpop.f32.mrf.mxu0
        %v1915 = vadd.f32 %v1806, %v1914
        %v1916 = vand.u32 %v1307, 4294901760
        %1917 = vmatmul.f32.gmra.mxu0 %v1916
        %v1918 = vpop.f32.mrf.mxu0
        %v1919 = vadd.f32 %v1812, %v1918
        %v1920 = vand.u32 %v1310, 4294901760
        %1921 = vmatmul.f32.gmra.mxu0 %v1920
        %v1922 = vpop.f32.mrf.mxu0
        %v1923 = vadd.f32 %v1818, %v1922
        %1924 = vdwg.mxu0
        %1925 = vmatpush.msra.mxu0 0.0
        %1926 = vmatpush.msra.mxu0 0.0
        %1927 = vmatpush.msra.mxu0 0.0
        %1928 = vmatpush.msra.mxu0 0.0
        %1929 = vmatpush.msra.mxu0 0.0
        %1930 = vmatpush.msra.mxu0 0.0
        %1931 = vmatpush.msra.mxu0 0.0
        %1932 = vmatpush.msra.mxu0 0.0
        %v1933 = vand.u32 %v393, 4294901760
        %1934 = vmatpush.msra.mxu0 %v1933
        %v1935 = vand.u32 %v392, 4294901760
        %1936 = vmatpush.msra.mxu0 %v1935
        %v1937 = vand.u32 %v391, 4294901760
        %1938 = vmatpush.msra.mxu0 %v1937
        %v1939 = vand.u32 %v390, 4294901760
        %1940 = vmatpush.msra.mxu0 %v1939
        %v1941 = vand.u32 %v389, 4294901760
        %1942 = vmatpush.msra.mxu0 %v1941
        %v1943 = vand.u32 %v388, 4294901760
        %1944 = vmatpush.msra.mxu0 %v1943
        %v1945 = vand.u32 %v387, 4294901760
        %1946 = vmatpush.msra.mxu0 %v1945
        %v1947 = vand.u32 %v386, 4294901760
        %1948 = vmatpush.msra.mxu0 %v1947
        %v1949 = vand.u32 %v1265, 4294901760
        %1950 = vmatmul.f32.gmra.mxu0 %v1949
        %v1951 = vpop.f32.mrf.mxu0
        %v1952 = vadd.f32 %v1863, %v1951
        %v1953 = vand.u32 %v1268, 4294901760
        %1954 = vmatmul.f32.gmra.mxu0 %v1953
        %v1955 = vpop.f32.mrf.mxu0
        %v1956 = vadd.f32 %v1867, %v1955
        %v1957 = vand.u32 %v1271, 4294901760
        %1958 = vmatmul.f32.gmra.mxu0 %v1957
        %v1959 = vpop.f32.mrf.mxu0
        %v1960 = vadd.f32 %v1871, %v1959
        %v1961 = vand.u32 %v1274, 4294901760
        %1962 = vmatmul.f32.gmra.mxu0 %v1961
        %v1963 = vpop.f32.mrf.mxu0
        %v1964 = vadd.f32 %v1875, %v1963
        %v1965 = vand.u32 %v1277, 4294901760
        %1966 = vmatmul.f32.gmra.mxu0 %v1965
        %v1967 = vpop.f32.mrf.mxu0
        %v1968 = vadd.f32 %v1879, %v1967
        %v1969 = vand.u32 %v1280, 4294901760
        %1970 = vmatmul.f32.gmra.mxu0 %v1969
        %v1971 = vpop.f32.mrf.mxu0
        %v1972 = vadd.f32 %v1883, %v1971
        %v1973 = vand.u32 %v1283, 4294901760
        %1974 = vmatmul.f32.gmra.mxu0 %v1973
        %v1975 = vpop.f32.mrf.mxu0
        %v1976 = vadd.f32 %v1887, %v1975
        %v1977 = vand.u32 %v1286, 4294901760
        %1978 = vmatmul.f32.gmra.mxu0 %v1977
        %v1979 = vpop.f32.mrf.mxu0
        %v1980 = vadd.f32 %v1891, %v1979
        %v1981 = vand.u32 %v1289, 4294901760
        %1982 = vmatmul.f32.gmra.mxu0 %v1981
        %v1983 = vpop.f32.mrf.mxu0
        %v1984 = vadd.f32 %v1895, %v1983
        %v1985 = vand.u32 %v1292, 4294901760
        %1986 = vmatmul.f32.gmra.mxu0 %v1985
        %v1987 = vpop.f32.mrf.mxu0
        %v1988 = vadd.f32 %v1899, %v1987
        %v1989 = vand.u32 %v1295, 4294901760
        %1990 = vmatmul.f32.gmra.mxu0 %v1989
        %v1991 = vpop.f32.mrf.mxu0
        %v1992 = vadd.f32 %v1903, %v1991
        %v1993 = vand.u32 %v1298, 4294901760
        %1994 = vmatmul.f32.gmra.mxu0 %v1993
        %v1995 = vpop.f32.mrf.mxu0
        %v1996 = vadd.f32 %v1907, %v1995
        %v1997 = vand.u32 %v1301, 4294901760
        %1998 = vmatmul.f32.gmra.mxu0 %v1997
        %v1999 = vpop.f32.mrf.mxu0
        %v2000 = vadd.f32 %v1911, %v1999
        %v2001 = vand.u32 %v1304, 4294901760
        %2002 = vmatmul.f32.gmra.mxu0 %v2001
        %v2003 = vpop.f32.mrf.mxu0
        %v2004 = vadd.f32 %v1915, %v2003
        %v2005 = vand.u32 %v1307, 4294901760
        %2006 = vmatmul.f32.gmra.mxu0 %v2005
        %v2007 = vpop.f32.mrf.mxu0
        %v2008 = vadd.f32 %v1919, %v2007
        %v2009 = vand.u32 %v1310, 4294901760
        %2010 = vmatmul.f32.gmra.mxu0 %v2009
        %v2011 = vpop.f32.mrf.mxu0
        %v2012 = vadd.f32 %v1923, %v2011
        %2013 = vdwg.mxu0
        %p2014 = scmp.eq.s32.totalorder %s38, 0
        // Predicated region
        $region37: #{tpu_custom_call.1} parent=27 // pred_check
          %p2015 = pneg %p2014
        $region38: #{tpu_custom_call.1} parent=27 // pred_check_branch
          %2017 = sbr.rel (%p2015) target = $region40
        $region39: #{tpu_custom_call.1} parent=27 // pred_region
          %2018 = vst [vmem:[%s344] sm:$0xff] %v1170
          %2019 = vst [vmem:[%s344 + $0x8] sm:$0xff] %v1174
          %2020 = vst [vmem:[%s344 + $0x10] sm:$0xff] %v1178
          %2021 = vst [vmem:[%s344 + $0x18] sm:$0xff] %v1182
          %2022 = vst [vmem:[%s344 + $0x20] sm:$0xff] %v1186
          %2023 = vst [vmem:[%s344 + $0x28] sm:$0xff] %v1190
          %2024 = vst [vmem:[%s344 + $0x30] sm:$0xff] %v1194
          %2025 = vst [vmem:[%s344 + $0x38] sm:$0xff] %v1198
          %2026 = vst [vmem:[%s344 + $0x40] sm:$0xff] %v1202
          %2027 = vst [vmem:[%s344 + $0x48] sm:$0xff] %v1206
          %2028 = vst [vmem:[%s344 + $0x50] sm:$0xff] %v1210
          %2029 = vst [vmem:[%s344 + $0x58] sm:$0xff] %v1214
          %2030 = vst [vmem:[%s344 + $0x60] sm:$0xff] %v1218
          %2031 = vst [vmem:[%s344 + $0x68] sm:$0xff] %v1222
          %2032 = vst [vmem:[%s344 + $0x70] sm:$0xff] %v1226
          %2033 = vst [vmem:[%s344 + $0x78] sm:$0xff] %v1230
          %2034 = vst [vmem:[%s351] sm:$0xff] %v1952
          %2035 = vst [vmem:[%s351 + $0x8] sm:$0xff] %v1956
          %2036 = vst [vmem:[%s351 + $0x10] sm:$0xff] %v1960
          %2037 = vst [vmem:[%s351 + $0x18] sm:$0xff] %v1964
          %2038 = vst [vmem:[%s351 + $0x20] sm:$0xff] %v1968
          %2039 = vst [vmem:[%s351 + $0x28] sm:$0xff] %v1972
          %2040 = vst [vmem:[%s351 + $0x30] sm:$0xff] %v1976
          %2041 = vst [vmem:[%s351 + $0x38] sm:$0xff] %v1980
          %2042 = vst [vmem:[%s351 + $0x40] sm:$0xff] %v1984
          %2043 = vst [vmem:[%s351 + $0x48] sm:$0xff] %v1988
          %2044 = vst [vmem:[%s351 + $0x50] sm:$0xff] %v1992
          %2045 = vst [vmem:[%s351 + $0x58] sm:$0xff] %v1996
          %2046 = vst [vmem:[%s351 + $0x60] sm:$0xff] %v2000
          %2047 = vst [vmem:[%s351 + $0x68] sm:$0xff] %v2004
          %2048 = vst [vmem:[%s351 + $0x70] sm:$0xff] %v2008
          %2049 = vst [vmem:[%s351 + $0x78] sm:$0xff] %v2012
          %2050 = vst [vmem:[%s371] sm:$0x1] %v448
          %2051 = vst [vmem:[%s358] sm:$0xff] 0.0
          %2052 = vst [vmem:[%s365] sm:$0xff] 0.0
          %2053 = vst [vmem:[%s358] sm:$0x1] %v406
          %2054 = vst [vmem:[%s365] sm:$0x1] %v419
        $region40: #{tpu_custom_call.1} parent=27 // pred_fallthru
          _
        %p2055 = scmp.gt.s32.totalorder %s38, 0
        // Predicated region
        $region41: #{tpu_custom_call.1} parent=27 // pred_check
          %p2056 = pneg %p2055
        $region42: #{tpu_custom_call.1} parent=27 // pred_check_branch
          %2058 = sbr.rel (%p2056) target = $region44
        $region43: #{tpu_custom_call.1} parent=27 // pred_region
          %v2059 = vld [vmem:[%s344] sm:$0xff]
          %v2060 = vld [vmem:[%s344 + $0x8] sm:$0xff]
          %v2061 = vld [vmem:[%s344 + $0x10] sm:$0xff]
          %v2062 = vld [vmem:[%s344 + $0x18] sm:$0xff]
          %v2063 = vld [vmem:[%s344 + $0x20] sm:$0xff]
          %v2064 = vld [vmem:[%s344 + $0x28] sm:$0xff]
          %v2065 = vld [vmem:[%s344 + $0x30] sm:$0xff]
          %v2066 = vld [vmem:[%s344 + $0x38] sm:$0xff]
          %v2067 = vld [vmem:[%s344 + $0x40] sm:$0xff]
          %v2068 = vld [vmem:[%s344 + $0x48] sm:$0xff]
          %v2069 = vld [vmem:[%s344 + $0x50] sm:$0xff]
          %v2070 = vld [vmem:[%s344 + $0x58] sm:$0xff]
          %v2071 = vld [vmem:[%s344 + $0x60] sm:$0xff]
          %v2072 = vld [vmem:[%s344 + $0x68] sm:$0xff]
          %v2073 = vld [vmem:[%s344 + $0x70] sm:$0xff]
          %v2074 = vld [vmem:[%s344 + $0x78] sm:$0xff]
          %v2075 = vadd.f32 %v2059, %v1170
          %v2076 = vadd.f32 %v2060, %v1174
          %v2077 = vadd.f32 %v2061, %v1178
          %v2078 = vadd.f32 %v2062, %v1182
          %v2079 = vadd.f32 %v2063, %v1186
          %v2080 = vadd.f32 %v2064, %v1190
          %v2081 = vadd.f32 %v2065, %v1194
          %v2082 = vadd.f32 %v2066, %v1198
          %v2083 = vadd.f32 %v2067, %v1202
          %v2084 = vadd.f32 %v2068, %v1206
          %v2085 = vadd.f32 %v2069, %v1210
          %v2086 = vadd.f32 %v2070, %v1214
          %v2087 = vadd.f32 %v2071, %v1218
          %v2088 = vadd.f32 %v2072, %v1222
          %v2089 = vadd.f32 %v2073, %v1226
          %v2090 = vadd.f32 %v2074, %v1230
          %2091 = vst [vmem:[%s344] sm:$0xff] %v2075
          %2092 = vst [vmem:[%s344 + $0x8] sm:$0xff] %v2076
          %2093 = vst [vmem:[%s344 + $0x10] sm:$0xff] %v2077
          %2094 = vst [vmem:[%s344 + $0x18] sm:$0xff] %v2078
          %2095 = vst [vmem:[%s344 + $0x20] sm:$0xff] %v2079
          %2096 = vst [vmem:[%s344 + $0x28] sm:$0xff] %v2080
          %2097 = vst [vmem:[%s344 + $0x30] sm:$0xff] %v2081
          %2098 = vst [vmem:[%s344 + $0x38] sm:$0xff] %v2082
          %2099 = vst [vmem:[%s344 + $0x40] sm:$0xff] %v2083
          %2100 = vst [vmem:[%s344 + $0x48] sm:$0xff] %v2084
          %2101 = vst [vmem:[%s344 + $0x50] sm:$0xff] %v2085
          %2102 = vst [vmem:[%s344 + $0x58] sm:$0xff] %v2086
          %2103 = vst [vmem:[%s344 + $0x60] sm:$0xff] %v2087
          %2104 = vst [vmem:[%s344 + $0x68] sm:$0xff] %v2088
          %2105 = vst [vmem:[%s344 + $0x70] sm:$0xff] %v2089
          %2106 = vst [vmem:[%s344 + $0x78] sm:$0xff] %v2090
          %v2107 = vld [vmem:[%s351] sm:$0xff]
          %v2108 = vld [vmem:[%s351 + $0x8] sm:$0xff]
          %v2109 = vld [vmem:[%s351 + $0x10] sm:$0xff]
          %v2110 = vld [vmem:[%s351 + $0x18] sm:$0xff]
          %v2111 = vld [vmem:[%s351 + $0x20] sm:$0xff]
          %v2112 = vld [vmem:[%s351 + $0x28] sm:$0xff]
          %v2113 = vld [vmem:[%s351 + $0x30] sm:$0xff]
          %v2114 = vld [vmem:[%s351 + $0x38] sm:$0xff]
          %v2115 = vld [vmem:[%s351 + $0x40] sm:$0xff]
          %v2116 = vld [vmem:[%s351 + $0x48] sm:$0xff]
          %v2117 = vld [vmem:[%s351 + $0x50] sm:$0xff]
          %v2118 = vld [vmem:[%s351 + $0x58] sm:$0xff]
          %v2119 = vld [vmem:[%s351 + $0x60] sm:$0xff]
          %v2120 = vld [vmem:[%s351 + $0x68] sm:$0xff]
          %v2121 = vld [vmem:[%s351 + $0x70] sm:$0xff]
          %v2122 = vld [vmem:[%s351 + $0x78] sm:$0xff]
          %v2123 = vadd.f32 %v2107, %v1952
          %v2124 = vadd.f32 %v2108, %v1956
          %v2125 = vadd.f32 %v2109, %v1960
          %v2126 = vadd.f32 %v2110, %v1964
          %v2127 = vadd.f32 %v2111, %v1968
          %v2128 = vadd.f32 %v2112, %v1972
          %v2129 = vadd.f32 %v2113, %v1976
          %v2130 = vadd.f32 %v2114, %v1980
          %v2131 = vadd.f32 %v2115, %v1984
          %v2132 = vadd.f32 %v2116, %v1988
          %v2133 = vadd.f32 %v2117, %v1992
          %v2134 = vadd.f32 %v2118, %v1996
          %v2135 = vadd.f32 %v2119, %v2000
          %v2136 = vadd.f32 %v2120, %v2004
          %v2137 = vadd.f32 %v2121, %v2008
          %v2138 = vadd.f32 %v2122, %v2012
          %2139 = vst [vmem:[%s351] sm:$0xff] %v2123
          %2140 = vst [vmem:[%s351 + $0x8] sm:$0xff] %v2124
          %2141 = vst [vmem:[%s351 + $0x10] sm:$0xff] %v2125
          %2142 = vst [vmem:[%s351 + $0x18] sm:$0xff] %v2126
          %2143 = vst [vmem:[%s351 + $0x20] sm:$0xff] %v2127
          %2144 = vst [vmem:[%s351 + $0x28] sm:$0xff] %v2128
          %2145 = vst [vmem:[%s351 + $0x30] sm:$0xff] %v2129
          %2146 = vst [vmem:[%s351 + $0x38] sm:$0xff] %v2130
          %2147 = vst [vmem:[%s351 + $0x40] sm:$0xff] %v2131
          %2148 = vst [vmem:[%s351 + $0x48] sm:$0xff] %v2132
          %2149 = vst [vmem:[%s351 + $0x50] sm:$0xff] %v2133
          %2150 = vst [vmem:[%s351 + $0x58] sm:$0xff] %v2134
          %2151 = vst [vmem:[%s351 + $0x60] sm:$0xff] %v2135
          %2152 = vst [vmem:[%s351 + $0x68] sm:$0xff] %v2136
          %2153 = vst [vmem:[%s351 + $0x70] sm:$0xff] %v2137
          %2154 = vst [vmem:[%s351 + $0x78] sm:$0xff] %v2138
          %v2155 = vld [vmem:[%s371] sm:$0x1]
          %v2156 = vadd.f32 %v2155, %v448
          %2157 = vst [vmem:[%s371] sm:$0x1] %v2156
          %v2158 = vld [vmem:[%s358] sm:$0x1]
          %v2159 = vadd.f32 %v2158, %v406
          %2160 = vst [vmem:[%s358] sm:$0x1] %v2159
          %v2161 = vld [vmem:[%s365] sm:$0x1]
          %v2162 = vadd.f32 %v2161, %v419
          %2163 = vst [vmem:[%s365] sm:$0x1] %v2162
        $region44: #{tpu_custom_call.1} parent=27 // pred_fallthru
          _
        %s2164 = sand.u32 %s113, 1
        %s2165 = scalar_lea.sflag [#allocation4], %s2164
        %s2166 = sand.u32 %s113, 1
        %s2167 = smul.addr %s2166, 128
        %s2168 = scalar_lea.vmem [#allocation7], %s2167
        %s2169 = sand.u32 %s33, 1
        %s2170 = scalar_lea.sflag [#allocation9], %s2169
        %s2171 = sand.u32 %s139, 1
        %s2172 = smul.addr %s2171, 128
        %s2173 = scalar_lea.vmem [#allocation8], %s2172
        %s2174 = sand.u32 %s33, 1
        %s2175 = scalar_lea.sflag [#allocation9], %s2174
        %s2176 = sand.u32 %s165, 1
        %s2177 = smul.addr %s2176, 8
        %s2178 = scalar_lea.vmem [#allocation10], %s2177
        %s2179 = sand.u32 %s33, 1
        %s2180 = scalar_lea.sflag [#allocation12], %s2179
        %s2181 = sand.u32 %s191, 1
        %s2182 = smul.addr %s2181, 8
        %s2183 = scalar_lea.vmem [#allocation11], %s2182
        %s2184 = sand.u32 %s33, 1
        %s2185 = scalar_lea.sflag [#allocation12], %s2184
        %s2186 = sand.u32 %s217, 1
        %s2187 = scalar_lea.vmem [#allocation13], %s2186
        // Predicated region
        $region45: #{tpu_custom_call.1} parent=27 // pred_check
          %p2188 = pneg %p123
        $region46: #{tpu_custom_call.1} parent=27 // pred_check_branch
          %2190 = sbr.rel (%p2188) target = $region48
        $region47: #{tpu_custom_call.1} parent=27 // pred_region
          %2192 = vsyncadd %s2165, 0
          %s2193 = smul.addr %s37, 16
          %s2194 = smul.addr %s2193, 8
          %s2195 = scalar_lea.hbm %s2, %s2194
          %s2196 = sshll.u32 %s2168, 4
          %s2197 = int_to_ptr.vmem [resolvable:$true] %s2196
          %s2198 = sshll.u32 %s2195, 4
          %s2199 = int_to_ptr.hbm [resolvable:$true] %s2198
          %2204 = dma.vmem_to_hbm [thread:$0]  %s2197, 2048, %s2199, %s2165, 128, 128, 8
        $region48: #{tpu_custom_call.1} parent=27 // pred_fallthru
          _
        // Predicated region
        $region49: #{tpu_custom_call.1} parent=27 // pred_check
          %p2205 = pneg %p149
        $region50: #{tpu_custom_call.1} parent=27 // pred_check_branch
          %2207 = sbr.rel (%p2205) target = $region52
        $region51: #{tpu_custom_call.1} parent=27 // pred_region
          %2209 = vsyncadd %s2170, 0
          %s2210 = smul.addr %s37, 16
          %s2211 = smul.addr %s2210, 8
          %s2212 = scalar_lea.hbm %s3, %s2211
          %s2213 = sshll.u32 %s2173, 4
          %s2214 = int_to_ptr.vmem [resolvable:$true] %s2213
          %s2215 = sshll.u32 %s2212, 4
          %s2216 = int_to_ptr.hbm [resolvable:$true] %s2215
          %2221 = dma.vmem_to_hbm [thread:$0]  %s2214, 2048, %s2216, %s2170, 128, 128, 8
        $region52: #{tpu_custom_call.1} parent=27 // pred_fallthru
          _
        // Predicated region
        $region53: #{tpu_custom_call.1} parent=27 // pred_check
          %p2222 = pneg %p175
        $region54: #{tpu_custom_call.1} parent=27 // pred_check_branch
          %2224 = sbr.rel (%p2222) target = $region56
        $region55: #{tpu_custom_call.1} parent=27 // pred_region
          %2226 = vsyncadd %s2175, 0
          %s2227 = smul.addr %s37, 8
          %s2228 = scalar_lea.hbm %s4, %s2227
          %s2230 = sshll.u32 %s2178, 4
          %s2231 = int_to_ptr.vmem [resolvable:$true] %s2230
          %s2232 = sshll.u32 %s2228, 4
          %s2233 = int_to_ptr.hbm [resolvable:$true] %s2232
          %2235 = dma.vmem_to_hbm [thread:$0]  %s2231, 128, %s2233, %s2175
        $region56: #{tpu_custom_call.1} parent=27 // pred_fallthru
          _
        // Predicated region
        $region57: #{tpu_custom_call.1} parent=27 // pred_check
          %p2236 = pneg %p201
        $region58: #{tpu_custom_call.1} parent=27 // pred_check_branch
          %2238 = sbr.rel (%p2236) target = $region60
        $region59: #{tpu_custom_call.1} parent=27 // pred_region
          %2240 = vsyncadd %s2180, 0
          %s2241 = smul.addr %s37, 8
          %s2242 = scalar_lea.hbm %s5, %s2241
          %s2244 = sshll.u32 %s2183, 4
          %s2245 = int_to_ptr.vmem [resolvable:$true] %s2244
          %s2246 = sshll.u32 %s2242, 4
          %s2247 = int_to_ptr.hbm [resolvable:$true] %s2246
          %2249 = dma.vmem_to_hbm [thread:$0]  %s2245, 128, %s2247, %s2180
        $region60: #{tpu_custom_call.1} parent=27 // pred_fallthru
          _
        // Predicated region
        $region61: #{tpu_custom_call.1} parent=27 // pred_check
          %p2250 = pneg %p227
        $region62: #{tpu_custom_call.1} parent=27 // pred_check_branch
          %2252 = sbr.rel (%p2250) target = $region64
        $region63: #{tpu_custom_call.1} parent=27 // pred_region
          %2254 = vsyncadd %s2185, 0
          %s2255 = scalar_lea.hbm %s6, %s37
          %s2257 = sshll.u32 %s2187, 4
          %s2258 = int_to_ptr.vmem [resolvable:$true] %s2257
          %s2259 = sshll.u32 %s2255, 4
          %s2260 = int_to_ptr.hbm [resolvable:$true] %s2259
          %2262 = dma.vmem_to_hbm [thread:$0]  %s2258, 16, %s2260, %s2185
        $region64: #{tpu_custom_call.1} parent=27 // pred_fallthru
          _
      $region28: #{tpu_custom_call.1} parent=5 // pred_fallthru
        _
      %p2263 = scmp.le.s32.totalorder 2, %s28
      // Predicated region
      $region65: #{tpu_custom_call.1} parent=5 // pred_check
        %p2264 = pneg %p2263
      $region66: #{tpu_custom_call.1} parent=5 // pred_check_branch
        %2266 = sbr.rel (%p2264) target = $region68
      $region67: #{tpu_custom_call.1} parent=5 // pred_region
        %s2267 = ssub.s32 %s28, 2
        // Predicated region
        $region69: #{tpu_custom_call.1} parent=67 // pred_check
          %p2268 = pneg %p129
        $region70: #{tpu_custom_call.1} parent=67 // pred_check_branch
          %2270 = sbr.rel (%p2268) target = $region72
        $region71: #{tpu_custom_call.1} parent=67 // pred_region
          %s2271 = sand.u32 %s114, 1
          %s2272 = scalar_lea.sflag [#allocation4], %s2271
          %s2273 = sand.u32 %s114, 1
          %s2274 = smul.addr %s2273, 128
          %s2275 = scalar_lea.vmem [#allocation7], %s2274
          %2277 = dma.done %s2272, 2048
        $region72: #{tpu_custom_call.1} parent=67 // pred_fallthru
          _
        // Predicated region
        $region73: #{tpu_custom_call.1} parent=67 // pred_check
          %p2278 = pneg %p155
        $region74: #{tpu_custom_call.1} parent=67 // pred_check_branch
          %2280 = sbr.rel (%p2278) target = $region76
        $region75: #{tpu_custom_call.1} parent=67 // pred_region
          %s2281 = sand.u32 %s34, 1
          %s2282 = scalar_lea.sflag [#allocation9], %s2281
          %s2283 = sand.u32 %s140, 1
          %s2284 = smul.addr %s2283, 128
          %s2285 = scalar_lea.vmem [#allocation8], %s2284
          %2287 = dma.done %s2282, 2048
        $region76: #{tpu_custom_call.1} parent=67 // pred_fallthru
          _
        // Predicated region
        $region77: #{tpu_custom_call.1} parent=67 // pred_check
          %p2288 = pneg %p181
        $region78: #{tpu_custom_call.1} parent=67 // pred_check_branch
          %2290 = sbr.rel (%p2288) target = $region80
        $region79: #{tpu_custom_call.1} parent=67 // pred_region
          %s2291 = sand.u32 %s34, 1
          %s2292 = scalar_lea.sflag [#allocation9], %s2291
          %s2293 = sand.u32 %s166, 1
          %s2294 = smul.addr %s2293, 8
          %s2295 = scalar_lea.vmem [#allocation10], %s2294
          %2297 = dma.done %s2292, 128
        $region80: #{tpu_custom_call.1} parent=67 // pred_fallthru
          _
        // Predicated region
        $region81: #{tpu_custom_call.1} parent=67 // pred_check
          %p2298 = pneg %p207
        $region82: #{tpu_custom_call.1} parent=67 // pred_check_branch
          %2300 = sbr.rel (%p2298) target = $region84
        $region83: #{tpu_custom_call.1} parent=67 // pred_region
          %s2301 = sand.u32 %s34, 1
          %s2302 = scalar_lea.sflag [#allocation12], %s2301
          %s2303 = sand.u32 %s192, 1
          %s2304 = smul.addr %s2303, 8
          %s2305 = scalar_lea.vmem [#allocation11], %s2304
          %2307 = dma.done %s2302, 128
        $region84: #{tpu_custom_call.1} parent=67 // pred_fallthru
          _
        // Predicated region
        $region85: #{tpu_custom_call.1} parent=67 // pred_check
          %p2308 = pneg %p233
        $region86: #{tpu_custom_call.1} parent=67 // pred_check_branch
          %2310 = sbr.rel (%p2308) target = $region88
        $region87: #{tpu_custom_call.1} parent=67 // pred_region
          %s2311 = sand.u32 %s34, 1
          %s2312 = scalar_lea.sflag [#allocation12], %s2311
          %s2313 = sand.u32 %s218, 1
          %s2314 = scalar_lea.vmem [#allocation13], %s2313
          %2316 = dma.done %s2312, 16
        $region88: #{tpu_custom_call.1} parent=67 // pred_fallthru
          _
      $region68: #{tpu_custom_call.1} parent=5 // pred_fallthru
        _
    $region6: #{tpu_custom_call.1} parent=1 // loop_footer
      %s32 = sadd.s32 1, %s28
    $region7: #{tpu_custom_call.1} parent=1 // loop_footer_branch
      %27 = sbr.rel target = $region3
    $region8: #{tpu_custom_call.1} parent=1 // loop_exit
      _
    %2317 = vsyncpa [#allocation3], 1
    %s2318 = scalar_lea.sflag [#allocation3], 1
    %2319 = vsyncpa %s2318, 1
    %2320 = vsyncpa [#allocation6], 1
    %s2321 = scalar_lea.sflag [#allocation6], 1
    %2322 = vsyncpa %s2321, 1
    %2323 = vsyncpa [#allocation4], 1
    %s2324 = scalar_lea.sflag [#allocation4], 1
    %2325 = vsyncpa %s2324, 1
    %2326 = vsyncpa [#allocation9], 1
    %s2327 = scalar_lea.sflag [#allocation9], 1
    %2328 = vsyncpa %s2327, 1
    %2329 = vsyncpa [#allocation12], 1
    %s2330 = scalar_lea.sflag [#allocation12], 1
    %2331 = vsyncpa %s2330, 1

</llo_original>
